<compile_context>
chip_gen: v5e
topology: v5e:2x2
jax: 0.10.0
libtpu: 0.0.40
codegen_flags: <defaults>
</compile_context>

<pallas_src>
import functools

import jax
import jax.numpy as jnp
from jax.experimental import pallas as pl
from jax.experimental.pallas import tpu as pltpu


def _ceil_to(x, m):
    return ((x + m - 1) // m) * m


def _tile_bytes(shape, dtype):
    """Rough physical VMEM footprint of one block (lane/sublane padded)."""
    dims = [int(d) for d in shape]
    if dims:
        dims[-1] = _ceil_to(dims[-1], 128)
    if len(dims) >= 2:
        dims[-2] = _ceil_to(dims[-2], 8)
    n = 1
    for d in dims:
        n *= d
    return n * jnp.dtype(dtype).itemsize


# ---------------------------------------------------------------------------
# Kernel.  grid = (batch_block, pass, vocab_tile)
# ---------------------------------------------------------------------------
def _sent_copy_kernel(dec_ref, wv_ref, attn_w_ref, words_ref,
                      sr_ref, attn_s_ref, cseq_ref,
                      wgT_ref, bg_ref, wp2_ref, wp3_ref, bp_ref,
                      *refs, vt, v_vocab, compute_log_out):
    if compute_log_out:
        outs_ref, logout_ref = refs[0], refs[1]
        scratch = refs[2:]
    else:
        outs_ref, logout_ref = refs[0], None
        scratch = refs[1:]
    m_scr, l_scr, p2_scr, p3_scr, aw_scr, cp_scr, dec_scr = scratch

    Bb, T, H = dec_ref.shape
    S = wv_ref.shape[1]
    Ss = sr_ref.shape[1]
    Vt = wgT_ref.shape[1]

    k = pl.program_id(1)          # 0 = stats pass, 1 = emit pass
    v = pl.program_id(2)          # vocab tile index

    # -------- pass 0, first tile: per-batch-block gates / cached operands --------
    @pl.when((k == 0) & (v == 0))
    def _init():
        dec = dec_ref[...]                                     # (Bb,T,H) f32
        attn_w = jnp.mean(attn_w_ref[...], axis=1)             # (Bb,T,S)  head mean
        attn_s = jnp.mean(attn_s_ref[...], axis=1)             # (Bb,T,Ss) head mean

        # Gate weights: slice / reshape once (hoisted; JAX does not CSE broadcasts).
        w2 = wp2_ref[...]                                      # (1, 2H)
        w3 = wp3_ref[...]                                      # (1, 3H)
        w2_dec = w2[:, :H].reshape(1, 1, H)
        w2_cw = w2[:, H:].reshape(1, 1, H)
        w3_dec = w3[:, :H].reshape(1, 1, H)
        w3_cw = w3[:, H:2 * H].reshape(1, 1, H)
        w3_cs = w3[:, 2 * H:].reshape(1, 1, H)

        # The attention contexts feed ONLY the copy gates, so fold the tiny-M
        # (T rows) MXU context matmuls into f32 VPU/XLU reductions:
        #   <attn @ mem, w> == <attn, mem @ w>
        u2 = jnp.sum(wv_ref[...] * w2_cw, axis=-1)             # (Bb,S)
        u3w = jnp.sum(wv_ref[...] * w3_cw, axis=-1)            # (Bb,S)
        u3s = jnp.sum(sr_ref[...] * w3_cs, axis=-1)            # (Bb,Ss)

        pre2 = (jnp.sum(dec * w2_dec, axis=-1, keepdims=True)
                + jnp.sum(attn_w * u2[:, None, :], axis=-1, keepdims=True)
                + bp_ref[0])
        pre3 = (jnp.sum(dec * w3_dec, axis=-1, keepdims=True)
                + jnp.sum(attn_w * u3w[:, None, :], axis=-1, keepdims=True)
                + jnp.sum(attn_s * u3s[:, None, :], axis=-1, keepdims=True)
                + bp_ref[1])
        p2 = jax.nn.sigmoid(pre2)                              # word copy gate
        p3 = jax.nn.sigmoid(pre3)                              # sentence copy gate

        p2_scr[...] = p2
        p3_scr[...] = p3
        aw_scr[...] = attn_w.astype(jnp.bfloat16)
        cp_scr[...] = ((1.0 - p3) * attn_s).astype(jnp.bfloat16)
        dec_scr[...] = dec.reshape(Bb * T, H).astype(jnp.bfloat16)
        m_scr[...] = jnp.full_like(m_scr, -jnp.inf)
        l_scr[...] = jnp.zeros_like(l_scr)

    # -------- pass 0: online softmax stats over the real vocab tiles --------------
    @pl.when((k == 0) & (v * vt < v_vocab))
    def _stats():
        logits = jnp.dot(dec_scr[...], wgT_ref[...],
                         preferred_element_type=jnp.float32) + bg_ref[...]
        m_old = m_scr[...]
        m_new = jnp.maximum(m_old, jnp.max(logits, axis=-1, keepdims=True))
        l_scr[...] = (l_scr[...] * jnp.exp(m_old - m_new)
                      + jnp.sum(jnp.exp(logits - m_new), axis=-1, keepdims=True))
        m_scr[...] = m_new

    # -------- pass 1: emit one vocab tile of both outputs --------------------------
    @pl.when(k == 1)
    def _emit():
        p2 = p2_scr[...]
        p3 = p3_scr[...]
        inv_l = pl.reciprocal(l_scr[...], approx=True)
        logits = jnp.dot(dec_scr[...], wgT_ref[...],
                         preferred_element_type=jnp.float32) + bg_ref[...]
        sm = (jnp.exp(logits - m_scr[...]) * inv_l).reshape(Bb, T, Vt)

        base = v * vt
        col_w = jax.lax.broadcasted_iota(jnp.int32, (Bb, S, Vt), 2) + base
        oh_w = (col_w == words_ref[...]).astype(jnp.bfloat16)          # (Bb,S,Vt)
        attn_val = jnp.einsum('bts,bsv->btv', aw_scr[...], oh_w,
                              preferred_element_type=jnp.float32)
        col_s = jax.lax.broadcasted_iota(jnp.int32, (Bb, Ss, Vt), 2) + base
        oh_s = (col_s == cseq_ref[...]).astype(jnp.bfloat16)           # (Bb,Ss,Vt)
        scat = jnp.einsum('bts,bsv->btv', cp_scr[...], oh_s,
                          preferred_element_type=jnp.float32)

        out_word = p2 * sm + (1.0 - p2) * attn_val
        # max() is equivalent to the module's `outs[outs == -inf] = -300` because
        # any finite f32 log-probability is > -104.
        outs_ref[...] = jnp.maximum(jnp.log(p3 * out_word + scat),
                                    jnp.float32(-300.0))
        if compute_log_out:
            @pl.when(v * vt < v_vocab)
            def _():
                logout_ref[...] = jnp.log(out_word)


# ---------------------------------------------------------------------------
# Wrapper: layout plumbing, tiling choices, pallas_call.
# ---------------------------------------------------------------------------
def sent_copy_summarizer_forward(decoder_outputs_src, word_vec, attn_dist_src, words,
                                 sent_repr, attn_dist_sent, copy_seq,
                                 wg, bg, wp2, bp2, wp3, bp3, max_node_size,
                                 batch_block=None, vocab_tile=None,
                                 compute_log_out=True):
    """Returns (decoder_outputs_src, outs, log(out_word)) like the PyTorch module
    (log(out_word) is None when compute_log_out=False)."""
    B, T, H = decoder_outputs_src.shape
    S = word_vec.shape[1]
    Ss = sent_repr.shape[1]
    NH = attn_dist_src.shape[1]
    V = wg.shape[0]
    M = int(max_node_size)
    f32 = jnp.float32

    # --- batch block: keep >= 2 grid steps on the "parallel" batch axis when B >= 2
    # (v7x megacore + pipeline depth) while still targeting ~256 generator rows.
    if batch_block is None:
        target = max(1, 256 // max(T, 1))
        Bb = max(1, min(B // 2 if B >= 2 else 1, target))
        while B % Bb:
            Bb -= 1
    else:
        Bb = int(batch_block)
        assert B % Bb == 0, "batch_block must divide batch size"
    nb = B // Bb

    # --- vocab tile: inner "arbitrary" axis; sized so the bf16 weight tile plus the
    # per-tile f32 intermediates stay well inside v7x's 64 MiB VMEM (larger tiles,
    # e.g. 2048-4096, are fine on v5e/v6e's 128 MiB).
    if vocab_tile is None:
        vocab_tile = min(1024, _ceil_to(V, 128))
    Vt = max(128, (int(vocab_tile) // 128) * 128)
    Vp = _ceil_to(V, Vt)                        # padded vocab region
    Mp = _ceil_to(M, Vt) if M > 0 else 0        # padded extended-node region
    n_vtiles = Vp // Vt
    n_tiles = (Vp + Mp) // Vt

    # --- parameters: padded columns get zero weight and a -1e9 bias so they carry
    # exactly zero probability mass.
    wgT = wg.T.astype(jnp.bfloat16)                                  # (H, V) bf16
    pad_cols = Vp + Mp - V
    if pad_cols:
        wgT = jnp.concatenate([wgT, jnp.zeros((H, pad_cols), jnp.bfloat16)], axis=1)
        bg_full = jnp.concatenate([bg.reshape(1, V).astype(f32),
                                   jnp.full((1, pad_cols), -1e9, f32)], axis=1)
    else:
        bg_full = bg.reshape(1, V).astype(f32)
    wp2r = wp2.reshape(1, 2 * H).astype(f32)
    wp3r = wp3.reshape(1, 3 * H).astype(f32)
    bp = jnp.stack([bp2.reshape(()), bp3.reshape(())]).astype(f32)   # (2,) -> SMEM

    words3 = words.reshape(B, S, 1).astype(jnp.int32)
    cseq = copy_seq.astype(jnp.int32)
    if Vp != V:  # extended-node ids shift with the vocab padding
        cseq = jnp.where(cseq >= V, cseq + (Vp - V), cseq)
    cseq3 = cseq.reshape(B, Ss, 1)

    in_specs = [
        pl.BlockSpec((Bb, T, H), lambda b, k, v: (b, 0, 0)),          # decoder_outputs_src
        pl.BlockSpec((Bb, S, H), lambda b, k, v: (b, 0, 0)),          # word_vec
        pl.BlockSpec((Bb, NH, T, S), lambda b, k, v: (b, 0, 0, 0)),   # attn_dist_src
        pl.BlockSpec((Bb, S, 1), lambda b, k, v: (b, 0, 0)),          # words (ids)
        pl.BlockSpec((Bb, Ss, H), lambda b, k, v: (b, 0, 0)),         # sent_repr
        pl.BlockSpec((Bb, NH, T, Ss), lambda b, k, v: (b, 0, 0, 0)),  # attn_dist_sent
        pl.BlockSpec((Bb, Ss, 1), lambda b, k, v: (b, 0, 0)),         # copy_seq (ids)
        pl.BlockSpec((H, Vt), lambda b, k, v: (0, v)),                # generator weight^T tile
        pl.BlockSpec((1, Vt), lambda b, k, v: (0, v)),                # generator bias tile
        pl.BlockSpec((1, 2 * H), lambda b, k, v: (0, 0)),             # word-gate weight
        pl.BlockSpec((1, 3 * H), lambda b, k, v: (0, 0)),             # sent-gate weight
        pl.BlockSpec(memory_space=pltpu.MemorySpace.SMEM),            # [b2, b3] scalars
    ]

    # Outputs: nothing is written during pass 0, so pin the block index to tile 0
    # there (no stale writebacks); pass 1 walks the tiles lane-densely.
    out_shape = [jax.ShapeDtypeStruct((B, T, Vp + Mp), f32)]
    out_specs = [pl.BlockSpec((Bb, T, Vt), lambda b, k, v: (b, 0, v * k))]
    if compute_log_out:
        out_shape.append(jax.ShapeDtypeStruct((B, T, Vp), f32))
        out_specs.append(pl.BlockSpec(
            (Bb, T, Vt),
            lambda b, k, v: (b, 0, jnp.minimum(v, n_vtiles - 1) * k)))

    scratch_defs = [
        ((Bb * T, 1), f32),            # running row max
        ((Bb * T, 1), f32),            # running softmax denom
        ((Bb, T, 1), f32),             # p2 (word copy gate)
        ((Bb, T, 1), f32),             # p3 (sentence copy gate)
        ((Bb, T, S), jnp.bfloat16),    # head-mean word attention
        ((Bb, T, Ss), jnp.bfloat16),   # (1-p3) * head-mean sentence attention
        ((Bb * T, H), jnp.bfloat16),   # decoder states as MXU operand
    ]
    scratch_shapes = [pltpu.VMEM(s, d) for s, d in scratch_defs]

    # --- VMEM budget derived from the actual block sizes (clamped per generation).
    block_list = [
        ((Bb, T, H), f32), ((Bb, S, H), f32), ((Bb, NH, T, S), f32),
        ((Bb, S, 1), jnp.int32), ((Bb, Ss, H), f32), ((Bb, NH, T, Ss), f32),
        ((Bb, Ss, 1), jnp.int32), ((H, Vt), jnp.bfloat16), ((1, Vt), f32),
        ((1, 2 * H), f32), ((1, 3 * H), f32),
    ]
    in_bytes = sum(_tile_bytes(s, d) for s, d in block_list)
    out_bytes = _tile_bytes((Bb, T, Vt), f32) * (2 if compute_log_out else 1)
    scr_bytes = sum(_tile_bytes(s, d) for s, d in scratch_defs)
    inter_bytes = (10 * _tile_bytes((Bb * T, Vt), f32)
                   + 3 * _tile_bytes((Bb, S, Vt), jnp.int32)
                   + 3 * _tile_bytes((Bb, Ss, Vt), jnp.int32)
                   + 4 * _tile_bytes((Bb, T, H), f32))
    needed = 2 * in_bytes + 2 * out_bytes + scr_bytes + inter_bytes
    cap = 64 * 1024 * 1024             # v7x per-core VMEM (smallest generation)
    try:
        cap = int(pltpu.get_tpu_info().vmem_capacity_bytes)
    except Exception:
        pass
    vmem_limit = int(min(max(needed + (8 << 20), 32 << 20), int(cap * 0.9)))

    kernel = functools.partial(_sent_copy_kernel, vt=Vt, v_vocab=Vp,
                               compute_log_out=compute_log_out)
    res = pl.pallas_call(
        kernel,
        out_shape=tuple(out_shape),
        grid_spec=pltpu.PrefetchScalarGridSpec(
            num_scalar_prefetch=0,
            grid=(nb, 2, n_tiles),
            in_specs=in_specs,
            out_specs=out_specs,
            scratch_shapes=scratch_shapes),
        compiler_params=pltpu.CompilerParams(
            dimension_semantics=("parallel", "arbitrary", "arbitrary"),
            vmem_limit_bytes=vmem_limit),
    )(decoder_outputs_src, word_vec, attn_dist_src, words3,
      sent_repr, attn_dist_sent, cseq3, wgT, bg_full, wp2r, wp3r, bp)

    outs_p = res[0]
    if Vp == V and Mp == M:
        outs = outs_p
    else:
        outs = jnp.concatenate([outs_p[:, :, :V], outs_p[:, :, Vp:Vp + M]], axis=-1)
    log_out = None
    if compute_log_out:
        log_p = res[1]
        log_out = log_p if Vp == V else log_p[:, :, :V]
    return decoder_outputs_src, outs, log_out


# ---------------------------------------------------------------------------
# Plain-JAX reference (exact f32 module math).
# ---------------------------------------------------------------------------
def _reference(dec, wv, attn_src, words, sr, attn_sent, cseq,
               wg, bg, wp2, bp2, wp3, bp3, M):
    V = wg.shape[0]
    H = dec.shape[-1]

    attn_word = jnp.mean(attn_src, axis=1)
    ctx_w = jnp.einsum('bts,bsh->bth', attn_word, wv)
    logits = jnp.einsum('bth,vh->btv', dec, wg) + bg
    gen = jax.nn.softmax(logits, axis=-1)
    p2 = jax.nn.sigmoid(jnp.einsum('bth,h->bt', dec, wp2[0, :H])
                        + jnp.einsum('bth,h->bt', ctx_w, wp2[0, H:]) + bp2[0])[..., None]
    attn_val = jnp.einsum('bts,bsv->btv', attn_word,
                          jax.nn.one_hot(words, V, dtype=jnp.float32))
    out_w = p2 * gen + (1.0 - p2) * attn_val

    attn_s = jnp.mean(attn_sent, axis=1)
    ctx_s = jnp.einsum('bts,bsh->bth', attn_s, sr)
    p3 = jax.nn.sigmoid(jnp.einsum('bth,h->bt', dec, wp3[0, :H])
                        + jnp.einsum('bth,h->bt', ctx_w, wp3[0, H:2 * H])
                        + jnp.einsum('bth,h->bt', ctx_s, wp3[0, 2 * H:]) + bp3[0])[..., None]
    probs = jnp.concatenate(
        [p3 * out_w, jnp.zeros(out_w.shape[:2] + (M,), jnp.float32)], axis=-1)
    out_cat = probs + jnp.einsum('bts,bsv->btv', (1.0 - p3) * attn_s,
                                 jax.nn.one_hot(cseq, V + M, dtype=jnp.float32))
    outs = jnp.log(out_cat)
    outs = jnp.where(jnp.isneginf(outs), jnp.float32(-300.0), outs)
    return outs, jnp.log(out_w)


if __name__ == "__main__":
    key = jax.random.PRNGKey(0)
    B, T, H = 2, 8, 128          # batch, decoder steps, dec_hidden_size
    S_word, S_sent = 16, 8       # source word seq len, sentence-memory len
    NH, V, M = 4, 256, 128       # dec_heads, vocab_size, max_node_size

    ks = jax.random.split(key, 10)
    decoder_outputs_src = jax.random.normal(ks[0], (B, T, H), jnp.float32)
    word_vec = jax.random.normal(ks[1], (B, S_word, H), jnp.float32)
    attn_dist_src = jax.nn.softmax(
        jax.random.normal(ks[2], (B, NH, T, S_word), jnp.float32), axis=-1)
    sent_repr = jax.random.normal(ks[3], (B, S_sent, H), jnp.float32)
    attn_dist_sent = jax.nn.softmax(
        jax.random.normal(ks[4], (B, NH, T, S_sent), jnp.float32), axis=-1)
    words = jax.random.randint(ks[5], (B, S_word), 1, V, jnp.int32)
    # copy ids span both the in-vocab and the extended-node region
    copy_seq = jax.random.randint(ks[6], (B, S_sent), 1, V + M, jnp.int32)

    # Parameters in PyTorch layout (normal(0, 0.02) weights, zero biases).
    wg = 0.02 * jax.random.normal(ks[7], (V, H), jnp.float32)    # generator Linear weight
    bg = jnp.zeros((V,), jnp.float32)
    wp2 = 0.02 * jax.random.normal(ks[8], (1, 2 * H), jnp.float32)  # wordCopySumm.p
    bp2 = jnp.zeros((1,), jnp.float32)
    wp3 = 0.02 * jax.random.normal(ks[9], (1, 3 * H), jnp.float32)  # SentCopySummarizer.p
    bp3 = jnp.zeros((1,), jnp.float32)

    ref_outs, ref_log = _reference(decoder_outputs_src, word_vec, attn_dist_src, words,
                                   sent_repr, attn_dist_sent, copy_seq,
                                   wg, bg, wp2, bp2, wp3, bp3, M)

    # (1) multi-tile online-softmax path: V=256 -> 2 vocab tiles + 1 extended tile,
    #     batch axis has 2 "parallel" grid steps.
    dec_out, outs, log_out = sent_copy_summarizer_forward(
        decoder_outputs_src, word_vec, attn_dist_src, words,
        sent_repr, attn_dist_sent, copy_seq,
        wg, bg, wp2, bp2, wp3, bp3, M, vocab_tile=128)
    jax.block_until_ready((dec_out, outs, log_out))

    assert outs.shape == (B, T, V + M) and log_out.shape == (B, T, V)
    assert jnp.allclose(outs, ref_outs, atol=3e-2, rtol=3e-2)
    assert jnp.allclose(log_out, ref_log, atol=3e-2, rtol=3e-2)
    assert jnp.array_equal(outs == -300.0, ref_outs == -300.0)

    # (2) padded-tile path: vocab_tile=384 pads both the vocab and the extended
    #     region (copy ids get remapped, outputs get re-sliced) and the optional
    #     log(out_word) output is disabled.
    _, outs2, log2 = sent_copy_summarizer_forward(
        decoder_outputs_src, word_vec, attn_dist_src, words,
        sent_repr, attn_dist_sent, copy_seq,
        wg, bg, wp2, bp2, wp3, bp3, M, vocab_tile=384, compute_log_out=False)
    jax.block_until_ready(outs2)
    assert log2 is None and outs2.shape == (B, T, V + M)
    assert jnp.allclose(outs2, ref_outs, atol=3e-2, rtol=3e-2)
    assert jnp.array_equal(outs2 == -300.0, ref_outs == -300.0)

    print("KERNEL_OK")
</pallas_src>

<mosaic_0001>
module attributes {stable_mosaic.version = 11 : i64} {
  func.func @_sent_copy_kernel(%arg0: i32, %arg1: i32, %arg2: i32, %arg3: memref<1x8x128xf32, #tpu.memory_space<vmem>>, %arg4: memref<1x16x128xf32, #tpu.memory_space<vmem>>, %arg5: memref<1x4x8x16xf32, #tpu.memory_space<vmem>>, %arg6: memref<1x16x1xi32, #tpu.memory_space<vmem>>, %arg7: memref<1x8x128xf32, #tpu.memory_space<vmem>>, %arg8: memref<1x4x8x8xf32, #tpu.memory_space<vmem>>, %arg9: memref<1x8x1xi32, #tpu.memory_space<vmem>>, %arg10: memref<128x128xbf16, #tpu.memory_space<vmem>>, %arg11: memref<1x128xf32, #tpu.memory_space<vmem>>, %arg12: memref<1x256xf32, #tpu.memory_space<vmem>>, %arg13: memref<1x384xf32, #tpu.memory_space<vmem>>, %arg14: memref<2xf32, #tpu.memory_space<smem>>, %arg15: memref<1x8x128xf32, #tpu.memory_space<vmem>>, %arg16: memref<1x8x128xf32, #tpu.memory_space<vmem>>, %arg17: memref<8x1xf32, #tpu.memory_space<vmem>>, %arg18: memref<8x1xf32, #tpu.memory_space<vmem>>, %arg19: memref<1x8x1xf32, #tpu.memory_space<vmem>>, %arg20: memref<1x8x1xf32, #tpu.memory_space<vmem>>, %arg21: memref<1x8x16xbf16, #tpu.memory_space<vmem>>, %arg22: memref<1x8x8xbf16, #tpu.memory_space<vmem>>, %arg23: memref<8x128xbf16, #tpu.memory_space<vmem>>) attributes {dimension_semantics = [#tpu.dimension_semantics<parallel>, #tpu.dimension_semantics<arbitrary>, #tpu.dimension_semantics<arbitrary>], iteration_bounds = array<i64: 2, 2, 3>, scalar_prefetch = 0 : i64, scratch_operands = 7 : i64, tpu.core_type = #tpu.core_type<tc>, window_params = [{transform_indices = @transform_0, window_bounds = array<i64: 1, 8, 128>}, {transform_indices = @transform_1, window_bounds = array<i64: 1, 16, 128>}, {transform_indices = @transform_2, window_bounds = array<i64: 1, 4, 8, 16>}, {transform_indices = @transform_3, window_bounds = array<i64: 1, 16, 1>}, {transform_indices = @transform_4, window_bounds = array<i64: 1, 8, 128>}, {transform_indices = @transform_5, window_bounds = array<i64: 1, 4, 8, 8>}, {transform_indices = @transform_6, window_bounds = array<i64: 1, 8, 1>}, {transform_indices = @transform_7, window_bounds = array<i64: 128, 128>}, {transform_indices = @transform_8, window_bounds = array<i64: 1, 128>}, {pipeline_mode = #tpu.pipeline_mode<synchronous>, transform_indices = @transform_9, window_bounds = array<i64: 1, 256>}, {pipeline_mode = #tpu.pipeline_mode<synchronous>, transform_indices = @transform_10, window_bounds = array<i64: 1, 384>}, {transform_indices = @transform_11, window_bounds = array<i64: 2>}, {transform_indices = @transform_12, window_bounds = array<i64: 1, 8, 128>}, {transform_indices = @transform_13, window_bounds = array<i64: 1, 8, 128>}]} {
    %c0_i32 = arith.constant 0 : i32
    %0 = arith.cmpi eq, %arg1, %c0_i32 : i32
    %c0_i32_0 = arith.constant 0 : i32
    %1 = arith.cmpi eq, %arg2, %c0_i32_0 : i32
    %2 = arith.andi %0, %1 : i1
    %3 = arith.extui %2 : i1 to i32
    %c0_i32_1 = arith.constant 0 : i32
    %4 = arith.cmpi ne, %3, %c0_i32_1 : i32
    scf.if %4 {
      %c0 = arith.constant 0 : index
      %c0_5 = arith.constant 0 : index
      %c0_6 = arith.constant 0 : index
      %14 = vector.load %arg3[%c0, %c0_5, %c0_6] : memref<1x8x128xf32, #tpu.memory_space<vmem>>, vector<1x8x128xf32>
      %c0_7 = arith.constant 0 : index
      %c0_8 = arith.constant 0 : index
      %c0_9 = arith.constant 0 : index
      %c0_10 = arith.constant 0 : index
      %15 = vector.load %arg5[%c0_7, %c0_8, %c0_9, %c0_10] : memref<1x4x8x16xf32, #tpu.memory_space<vmem>>, vector<1x4x8x16xf32>
      %cst = arith.constant dense<0.000000e+00> : vector<1x8x16xf32>
      %16 = vector.multi_reduction <add>, %15, %cst [1] : vector<1x4x8x16xf32> to vector<1x8x16xf32>
      %cst_11 = arith.constant 4.000000e+00 : f32
      %17 = vector.broadcast %cst_11 : f32 to vector<1x8x16xf32>
      %18 = arith.divf %16, %17 : vector<1x8x16xf32>
      %c0_12 = arith.constant 0 : index
      %c0_13 = arith.constant 0 : index
      %c0_14 = arith.constant 0 : index
      %c0_15 = arith.constant 0 : index
      %19 = vector.load %arg8[%c0_12, %c0_13, %c0_14, %c0_15] : memref<1x4x8x8xf32, #tpu.memory_space<vmem>>, vector<1x4x8x8xf32>
      %cst_16 = arith.constant dense<0.000000e+00> : vector<1x8x8xf32>
      %20 = vector.multi_reduction <add>, %19, %cst_16 [1] : vector<1x4x8x8xf32> to vector<1x8x8xf32>
      %cst_17 = arith.constant 4.000000e+00 : f32
      %21 = vector.broadcast %cst_17 : f32 to vector<1x8x8xf32>
      %22 = arith.divf %20, %21 : vector<1x8x8xf32>
      %c0_18 = arith.constant 0 : index
      %c0_19 = arith.constant 0 : index
      %23 = vector.load %arg12[%c0_18, %c0_19] : memref<1x256xf32, #tpu.memory_space<vmem>>, vector<1x256xf32>
      %c0_20 = arith.constant 0 : index
      %c0_21 = arith.constant 0 : index
      %24 = vector.load %arg13[%c0_20, %c0_21] : memref<1x384xf32, #tpu.memory_space<vmem>>, vector<1x384xf32>
      %25 = vector.extract_strided_slice %23 {offsets = [0, 0], sizes = [1, 128], strides = [1, 1]} : vector<1x256xf32> to vector<1x128xf32>
      %26 = vector.shape_cast %25 : vector<1x128xf32> to vector<1x1x128xf32>
      %27 = vector.extract_strided_slice %23 {offsets = [0, 128], sizes = [1, 128], strides = [1, 1]} : vector<1x256xf32> to vector<1x128xf32>
      %28 = vector.shape_cast %27 : vector<1x128xf32> to vector<1x1x128xf32>
      %29 = vector.extract_strided_slice %24 {offsets = [0, 0], sizes = [1, 128], strides = [1, 1]} : vector<1x384xf32> to vector<1x128xf32>
      %30 = vector.shape_cast %29 : vector<1x128xf32> to vector<1x1x128xf32>
      %31 = vector.extract_strided_slice %24 {offsets = [0, 128], sizes = [1, 128], strides = [1, 1]} : vector<1x384xf32> to vector<1x128xf32>
      %32 = vector.shape_cast %31 : vector<1x128xf32> to vector<1x1x128xf32>
      %33 = vector.extract_strided_slice %24 {offsets = [0, 256], sizes = [1, 128], strides = [1, 1]} : vector<1x384xf32> to vector<1x128xf32>
      %34 = vector.shape_cast %33 : vector<1x128xf32> to vector<1x1x128xf32>
      %c0_22 = arith.constant 0 : index
      %c0_23 = arith.constant 0 : index
      %c0_24 = arith.constant 0 : index
      %35 = vector.load %arg4[%c0_22, %c0_23, %c0_24] : memref<1x16x128xf32, #tpu.memory_space<vmem>>, vector<1x16x128xf32>
      %36 = vector.broadcast %28 : vector<1x1x128xf32> to vector<1x16x128xf32>
      %37 = arith.mulf %35, %36 : vector<1x16x128xf32>
      %cst_25 = arith.constant dense<0.000000e+00> : vector<1x16xf32>
      %38 = vector.multi_reduction <add>, %37, %cst_25 [2] : vector<1x16x128xf32> to vector<1x16xf32>
      %c0_26 = arith.constant 0 : index
      %c0_27 = arith.constant 0 : index
      %c0_28 = arith.constant 0 : index
      %39 = vector.load %arg4[%c0_26, %c0_27, %c0_28] : memref<1x16x128xf32, #tpu.memory_space<vmem>>, vector<1x16x128xf32>
      %40 = vector.broadcast %32 : vector<1x1x128xf32> to vector<1x16x128xf32>
      %41 = arith.mulf %39, %40 : vector<1x16x128xf32>
      %cst_29 = arith.constant dense<0.000000e+00> : vector<1x16xf32>
      %42 = vector.multi_reduction <add>, %41, %cst_29 [2] : vector<1x16x128xf32> to vector<1x16xf32>
      %c0_30 = arith.constant 0 : index
      %c0_31 = arith.constant 0 : index
      %c0_32 = arith.constant 0 : index
      %43 = vector.load %arg7[%c0_30, %c0_31, %c0_32] : memref<1x8x128xf32, #tpu.memory_space<vmem>>, vector<1x8x128xf32>
      %44 = vector.broadcast %34 : vector<1x1x128xf32> to vector<1x8x128xf32>
      %45 = arith.mulf %43, %44 : vector<1x8x128xf32>
      %cst_33 = arith.constant dense<0.000000e+00> : vector<1x8xf32>
      %46 = vector.multi_reduction <add>, %45, %cst_33 [2] : vector<1x8x128xf32> to vector<1x8xf32>
      %47 = vector.broadcast %26 : vector<1x1x128xf32> to vector<1x8x128xf32>
      %48 = arith.mulf %14, %47 : vector<1x8x128xf32>
      %cst_34 = arith.constant dense<0.000000e+00> : vector<1x8xf32>
      %49 = vector.multi_reduction <add>, %48, %cst_34 [2] : vector<1x8x128xf32> to vector<1x8xf32>
      %50 = vector.shape_cast %49 : vector<1x8xf32> to vector<1x8x1xf32>
      %51 = vector.shape_cast %38 : vector<1x16xf32> to vector<1x1x16xf32>
      %52 = vector.broadcast %51 : vector<1x1x16xf32> to vector<1x8x16xf32>
      %53 = arith.mulf %18, %52 : vector<1x8x16xf32>
      %cst_35 = arith.constant dense<0.000000e+00> : vector<1x8xf32>
      %54 = vector.multi_reduction <add>, %53, %cst_35 [2] : vector<1x8x16xf32> to vector<1x8xf32>
      %55 = vector.shape_cast %54 : vector<1x8xf32> to vector<1x8x1xf32>
      %56 = arith.addf %50, %55 : vector<1x8x1xf32>
      %c0_36 = arith.constant 0 : index
      %57 = memref.load %arg14[%c0_36] : memref<2xf32, #tpu.memory_space<smem>>
      %58 = vector.broadcast %57 : f32 to vector<1x8x1xf32>
      %59 = arith.addf %56, %58 : vector<1x8x1xf32>
      %60 = vector.broadcast %30 : vector<1x1x128xf32> to vector<1x8x128xf32>
      %61 = arith.mulf %14, %60 : vector<1x8x128xf32>
      %cst_37 = arith.constant dense<0.000000e+00> : vector<1x8xf32>
      %62 = vector.multi_reduction <add>, %61, %cst_37 [2] : vector<1x8x128xf32> to vector<1x8xf32>
      %63 = vector.shape_cast %62 : vector<1x8xf32> to vector<1x8x1xf32>
      %64 = vector.shape_cast %42 : vector<1x16xf32> to vector<1x1x16xf32>
      %65 = vector.broadcast %64 : vector<1x1x16xf32> to vector<1x8x16xf32>
      %66 = arith.mulf %18, %65 : vector<1x8x16xf32>
      %cst_38 = arith.constant dense<0.000000e+00> : vector<1x8xf32>
      %67 = vector.multi_reduction <add>, %66, %cst_38 [2] : vector<1x8x16xf32> to vector<1x8xf32>
      %68 = vector.shape_cast %67 : vector<1x8xf32> to vector<1x8x1xf32>
      %69 = arith.addf %63, %68 : vector<1x8x1xf32>
      %70 = vector.shape_cast %46 : vector<1x8xf32> to vector<1x1x8xf32>
      %71 = vector.broadcast %70 : vector<1x1x8xf32> to vector<1x8x8xf32>
      %72 = arith.mulf %22, %71 : vector<1x8x8xf32>
      %cst_39 = arith.constant dense<0.000000e+00> : vector<1x8xf32>
      %73 = vector.multi_reduction <add>, %72, %cst_39 [2] : vector<1x8x8xf32> to vector<1x8xf32>
      %74 = vector.shape_cast %73 : vector<1x8xf32> to vector<1x8x1xf32>
      %75 = arith.addf %69, %74 : vector<1x8x1xf32>
      %c1 = arith.constant 1 : index
      %76 = memref.load %arg14[%c1] : memref<2xf32, #tpu.memory_space<smem>>
      %77 = vector.broadcast %76 : f32 to vector<1x8x1xf32>
      %78 = arith.addf %75, %77 : vector<1x8x1xf32>
      %79 = arith.negf %59 : vector<1x8x1xf32>
      %80 = math.exp %79 : vector<1x8x1xf32>
      %cst_40 = arith.constant 1.000000e+00 : f32
      %81 = vector.broadcast %cst_40 : f32 to vector<1x8x1xf32>
      %82 = arith.addf %81, %80 : vector<1x8x1xf32>
      %83 = arith.divf %81, %82 : vector<1x8x1xf32>
      %84 = arith.negf %78 : vector<1x8x1xf32>
      %85 = math.exp %84 : vector<1x8x1xf32>
      %cst_41 = arith.constant 1.000000e+00 : f32
      %86 = vector.broadcast %cst_41 : f32 to vector<1x8x1xf32>
      %87 = arith.addf %86, %85 : vector<1x8x1xf32>
      %88 = arith.divf %86, %87 : vector<1x8x1xf32>
      %c0_42 = arith.constant 0 : index
      %c0_43 = arith.constant 0 : index
      %c0_44 = arith.constant 0 : index
      %89 = vector.load %arg19[%c0_42, %c0_43, %c0_44] : memref<1x8x1xf32, #tpu.memory_space<vmem>>, vector<1x8x1xf32>
      tpu.vector_store %arg19[%c0_42, %c0_43, %c0_44], %83 {strides = array<i32>} : memref<1x8x1xf32, #tpu.memory_space<vmem>>, vector<1x8x1xf32>,
      %c0_45 = arith.constant 0 : index
      %c0_46 = arith.constant 0 : index
      %c0_47 = arith.constant 0 : index
      %90 = vector.load %arg20[%c0_45, %c0_46, %c0_47] : memref<1x8x1xf32, #tpu.memory_space<vmem>>, vector<1x8x1xf32>
      tpu.vector_store %arg20[%c0_45, %c0_46, %c0_47], %88 {strides = array<i32>} : memref<1x8x1xf32, #tpu.memory_space<vmem>>, vector<1x8x1xf32>,
      %91 = arith.truncf %18 : vector<1x8x16xf32> to vector<1x8x16xbf16>
      %c0_48 = arith.constant 0 : index
      %c0_49 = arith.constant 0 : index
      %c0_50 = arith.constant 0 : index
      %92 = vector.load %arg21[%c0_48, %c0_49, %c0_50] : memref<1x8x16xbf16, #tpu.memory_space<vmem>>, vector<1x8x16xbf16>
      tpu.vector_store %arg21[%c0_48, %c0_49, %c0_50], %91 {strides = array<i32>} : memref<1x8x16xbf16, #tpu.memory_space<vmem>>, vector<1x8x16xbf16>,
      %cst_51 = arith.constant 1.000000e+00 : f32
      %93 = vector.broadcast %cst_51 : f32 to vector<1x8x1xf32>
      %94 = arith.subf %93, %88 : vector<1x8x1xf32>
      %95 = vector.broadcast %94 : vector<1x8x1xf32> to vector<1x8x8xf32>
      %96 = arith.mulf %95, %22 : vector<1x8x8xf32>
      %97 = arith.truncf %96 : vector<1x8x8xf32> to vector<1x8x8xbf16>
      %c0_52 = arith.constant 0 : index
      %c0_53 = arith.constant 0 : index
      %c0_54 = arith.constant 0 : index
      %98 = vector.load %arg22[%c0_52, %c0_53, %c0_54] : memref<1x8x8xbf16, #tpu.memory_space<vmem>>, vector<1x8x8xbf16>
      tpu.vector_store %arg22[%c0_52, %c0_53, %c0_54], %97 {strides = array<i32>} : memref<1x8x8xbf16, #tpu.memory_space<vmem>>, vector<1x8x8xbf16>,
      %99 = vector.shape_cast %14 : vector<1x8x128xf32> to vector<8x128xf32>
      %100 = arith.truncf %99 : vector<8x128xf32> to vector<8x128xbf16>
      %c0_55 = arith.constant 0 : index
      %c0_56 = arith.constant 0 : index
      %101 = vector.load %arg23[%c0_55, %c0_56] : memref<8x128xbf16, #tpu.memory_space<vmem>>, vector<8x128xbf16>
      tpu.vector_store %arg23[%c0_55, %c0_56], %100 {strides = array<i32>} : memref<8x128xbf16, #tpu.memory_space<vmem>>, vector<8x128xbf16>,
      %cst_57 = arith.constant 0xFF800000 : f32
      %102 = vector.broadcast %cst_57 : f32 to vector<8x1xf32>
      %c0_58 = arith.constant 0 : index
      %c0_59 = arith.constant 0 : index
      %103 = vector.load %arg17[%c0_58, %c0_59] : memref<8x1xf32, #tpu.memory_space<vmem>>, vector<8x1xf32>
      tpu.vector_store %arg17[%c0_58, %c0_59], %102 {strides = array<i32>} : memref<8x1xf32, #tpu.memory_space<vmem>>, vector<8x1xf32>,
      %cst_60 = arith.constant 0.000000e+00 : f32
      %104 = vector.broadcast %cst_60 : f32 to vector<8x1xf32>
      %c0_61 = arith.constant 0 : index
      %c0_62 = arith.constant 0 : index
      %105 = vector.load %arg18[%c0_61, %c0_62] : memref<8x1xf32, #tpu.memory_space<vmem>>, vector<8x1xf32>
      tpu.vector_store %arg18[%c0_61, %c0_62], %104 {strides = array<i32>} : memref<8x1xf32, #tpu.memory_space<vmem>>, vector<8x1xf32>,
    } else {
    }
    %c0_i32_2 = arith.constant 0 : i32
    %5 = arith.cmpi eq, %arg1, %c0_i32_2 : i32
    %c128_i32 = arith.constant 128 : i32
    %6 = arith.muli %arg2, %c128_i32 : i32
    %c256_i32 = arith.constant 256 : i32
    %7 = arith.cmpi slt, %6, %c256_i32 : i32
    %8 = arith.andi %5, %7 : i1
    %9 = arith.extui %8 : i1 to i32
    %c0_i32_3 = arith.constant 0 : i32
    %10 = arith.cmpi ne, %9, %c0_i32_3 : i32
    scf.if %10 {
      %c0 = arith.constant 0 : index
      %c0_5 = arith.constant 0 : index
      %14 = vector.load %arg23[%c0, %c0_5] : memref<8x128xbf16, #tpu.memory_space<vmem>>, vector<8x128xbf16>
      %c0_6 = arith.constant 0 : index
      %c0_7 = arith.constant 0 : index
      %15 = vector.load %arg10[%c0_6, %c0_7] : memref<128x128xbf16, #tpu.memory_space<vmem>>, vector<128x128xbf16>
      %cst = arith.constant dense<0.000000e+00> : vector<8x128xf32>
      %16 = tpu.matmul %14, %15, %cst {dimension_numbers = #tpu.dot_dimension_numbers<[1], [0], [0], [1], [0, 0, 1, 1], [], []>} : vector<8x128xbf16>, vector<128x128xbf16>, vector<8x128xf32> -> vector<8x128xf32>
      %c0_8 = arith.constant 0 : index
      %c0_9 = arith.constant 0 : index
      %17 = vector.load %arg11[%c0_8, %c0_9] : memref<1x128xf32, #tpu.memory_space<vmem>>, vector<1x128xf32>
      %18 = vector.broadcast %17 : vector<1x128xf32> to vector<8x128xf32>
      %19 = arith.addf %16, %18 : vector<8x128xf32>
      %c0_10 = arith.constant 0 : index
      %c0_11 = arith.constant 0 : index
      %20 = vector.load %arg17[%c0_10, %c0_11] : memref<8x1xf32, #tpu.memory_space<vmem>>, vector<8x1xf32>
      %cst_12 = arith.constant dense<0xFF800000> : vector<8xf32>
      %21 = vector.multi_reduction <maximumf>, %19, %cst_12 [1] : vector<8x128xf32> to vector<8xf32>
      %22 = vector.shape_cast %21 : vector<8xf32> to vector<8x1xf32>
      %23 = arith.maximumf %20, %22 : vector<8x1xf32>
      %c0_13 = arith.constant 0 : index
      %c0_14 = arith.constant 0 : index
      %24 = vector.load %arg18[%c0_13, %c0_14] : memref<8x1xf32, #tpu.memory_space<vmem>>, vector<8x1xf32>
      %25 = arith.subf %20, %23 : vector<8x1xf32>
      %26 = math.exp %25 : vector<8x1xf32>
      %27 = arith.mulf %24, %26 : vector<8x1xf32>
      %28 = vector.broadcast %23 : vector<8x1xf32> to vector<8x128xf32>
      %29 = arith.subf %19, %28 : vector<8x128xf32>
      %30 = math.exp %29 : vector<8x128xf32>
      %cst_15 = arith.constant dense<0.000000e+00> : vector<8xf32>
      %31 = vector.multi_reduction <add>, %30, %cst_15 [1] : vector<8x128xf32> to vector<8xf32>
      %32 = vector.shape_cast %31 : vector<8xf32> to vector<8x1xf32>
      %33 = arith.addf %27, %32 : vector<8x1xf32>
      %c0_16 = arith.constant 0 : index
      %c0_17 = arith.constant 0 : index
      %34 = vector.load %arg18[%c0_16, %c0_17] : memref<8x1xf32, #tpu.memory_space<vmem>>, vector<8x1xf32>
      tpu.vector_store %arg18[%c0_16, %c0_17], %33 {strides = array<i32>} : memref<8x1xf32, #tpu.memory_space<vmem>>, vector<8x1xf32>,
      %c0_18 = arith.constant 0 : index
      %c0_19 = arith.constant 0 : index
      %35 = vector.load %arg17[%c0_18, %c0_19] : memref<8x1xf32, #tpu.memory_space<vmem>>, vector<8x1xf32>
      tpu.vector_store %arg17[%c0_18, %c0_19], %23 {strides = array<i32>} : memref<8x1xf32, #tpu.memory_space<vmem>>, vector<8x1xf32>,
    } else {
    }
    %c1_i32 = arith.constant 1 : i32
    %11 = arith.cmpi eq, %arg1, %c1_i32 : i32
    %12 = arith.extui %11 : i1 to i32
    %c0_i32_4 = arith.constant 0 : i32
    %13 = arith.cmpi ne, %12, %c0_i32_4 : i32
    scf.if %13 {
      %c0 = arith.constant 0 : index
      %c0_5 = arith.constant 0 : index
      %c0_6 = arith.constant 0 : index
      %14 = vector.load %arg19[%c0, %c0_5, %c0_6] : memref<1x8x1xf32, #tpu.memory_space<vmem>>, vector<1x8x1xf32>
      %c0_7 = arith.constant 0 : index
      %c0_8 = arith.constant 0 : index
      %c0_9 = arith.constant 0 : index
      %15 = vector.load %arg20[%c0_7, %c0_8, %c0_9] : memref<1x8x1xf32, #tpu.memory_space<vmem>>, vector<1x8x1xf32>
      %c0_10 = arith.constant 0 : index
      %c0_11 = arith.constant 0 : index
      %16 = vector.load %arg18[%c0_10, %c0_11] : memref<8x1xf32, #tpu.memory_space<vmem>>, vector<8x1xf32>
      %17 = tpu.reciprocal %16 {approx = true} : vector<8x1xf32> -> vector<8x1xf32>
      %c0_12 = arith.constant 0 : index
      %c0_13 = arith.constant 0 : index
      %18 = vector.load %arg23[%c0_12, %c0_13] : memref<8x128xbf16, #tpu.memory_space<vmem>>, vector<8x128xbf16>
      %c0_14 = arith.constant 0 : index
      %c0_15 = arith.constant 0 : index
      %19 = vector.load %arg10[%c0_14, %c0_15] : memref<128x128xbf16, #tpu.memory_space<vmem>>, vector<128x128xbf16>
      %cst = arith.constant dense<0.000000e+00> : vector<8x128xf32>
      %20 = tpu.matmul %18, %19, %cst {dimension_numbers = #tpu.dot_dimension_numbers<[1], [0], [0], [1], [0, 0, 1, 1], [], []>} : vector<8x128xbf16>, vector<128x128xbf16>, vector<8x128xf32> -> vector<8x128xf32>
      %c0_16 = arith.constant 0 : index
      %c0_17 = arith.constant 0 : index
      %21 = vector.load %arg11[%c0_16, %c0_17] : memref<1x128xf32, #tpu.memory_space<vmem>>, vector<1x128xf32>
      %22 = vector.broadcast %21 : vector<1x128xf32> to vector<8x128xf32>
      %23 = arith.addf %20, %22 : vector<8x128xf32>
      %c0_18 = arith.constant 0 : index
      %c0_19 = arith.constant 0 : index
      %24 = vector.load %arg17[%c0_18, %c0_19] : memref<8x1xf32, #tpu.memory_space<vmem>>, vector<8x1xf32>
      %25 = vector.broadcast %24 : vector<8x1xf32> to vector<8x128xf32>
      %26 = arith.subf %23, %25 : vector<8x128xf32>
      %27 = math.exp %26 : vector<8x128xf32>
      %28 = vector.broadcast %17 : vector<8x1xf32> to vector<8x128xf32>
      %29 = arith.mulf %27, %28 : vector<8x128xf32>
      %30 = vector.shape_cast %29 : vector<8x128xf32> to vector<1x8x128xf32>
      %c128_i32_20 = arith.constant 128 : i32
      %31 = arith.muli %arg2, %c128_i32_20 : i32
      %32 = tpu.iota {dimensions = array<i32: 2>} : vector<1x16x128xi32>
      %33 = vector.broadcast %31 : i32 to vector<1x16x128xi32>
      %34 = arith.addi %32, %33 : vector<1x16x128xi32>
      %c0_21 = arith.constant 0 : index
      %c0_22 = arith.constant 0 : index
      %c0_23 = arith.constant 0 : index
      %35 = vector.load %arg6[%c0_21, %c0_22, %c0_23] : memref<1x16x1xi32, #tpu.memory_space<vmem>>, vector<1x16x1xi32>
      %36 = vector.broadcast %35 : vector<1x16x1xi32> to vector<1x16x128xi32>
      %37 = arith.cmpi eq, %34, %36 : vector<1x16x128xi32>
      %38 = arith.extui %37 : vector<1x16x128xi1> to vector<1x16x128xi32>
      %39 = arith.sitofp %38 : vector<1x16x128xi32> to vector<1x16x128xf32>
      %40 = arith.truncf %39 : vector<1x16x128xf32> to vector<1x16x128xbf16>
      %c0_24 = arith.constant 0 : index
      %c0_25 = arith.constant 0 : index
      %c0_26 = arith.constant 0 : index
      %41 = vector.load %arg21[%c0_24, %c0_25, %c0_26] : memref<1x8x16xbf16, #tpu.memory_space<vmem>>, vector<1x8x16xbf16>
      "tpu.trace_start"() <{level = 10 : i32, message = "bts,bsv->btv"}> : () -> ()
      %cst_27 = arith.constant dense<0.000000e+00> : vector<1x8x128xf32>
      %42 = tpu.matmul %41, %40, %cst_27 {dimension_numbers = #tpu.dot_dimension_numbers<[2], [1], [1], [2], [0, 0, 0, 1, 1, 2], [0], [0]>} : vector<1x8x16xbf16>, vector<1x16x128xbf16>, vector<1x8x128xf32> -> vector<1x8x128xf32>
      "tpu.trace_stop"() : () -> ()
      %43 = tpu.iota {dimensions = array<i32: 2>} : vector<1x8x128xi32>
      %44 = vector.broadcast %31 : i32 to vector<1x8x128xi32>
      %45 = arith.addi %43, %44 : vector<1x8x128xi32>
      %c0_28 = arith.constant 0 : index
      %c0_29 = arith.constant 0 : index
      %c0_30 = arith.constant 0 : index
      %46 = vector.load %arg9[%c0_28, %c0_29, %c0_30] : memref<1x8x1xi32, #tpu.memory_space<vmem>>, vector<1x8x1xi32>
      %47 = vector.broadcast %46 : vector<1x8x1xi32> to vector<1x8x128xi32>
      %48 = arith.cmpi eq, %45, %47 : vector<1x8x128xi32>
      %49 = arith.extui %48 : vector<1x8x128xi1> to vector<1x8x128xi32>
      %50 = arith.sitofp %49 : vector<1x8x128xi32> to vector<1x8x128xf32>
      %51 = arith.truncf %50 : vector<1x8x128xf32> to vector<1x8x128xbf16>
      %c0_31 = arith.constant 0 : index
      %c0_32 = arith.constant 0 : index
      %c0_33 = arith.constant 0 : index
      %52 = vector.load %arg22[%c0_31, %c0_32, %c0_33] : memref<1x8x8xbf16, #tpu.memory_space<vmem>>, vector<1x8x8xbf16>
      "tpu.trace_start"() <{level = 10 : i32, message = "bts,bsv->btv"}> : () -> ()
      %cst_34 = arith.constant dense<0.000000e+00> : vector<1x8x128xf32>
      %53 = tpu.matmul %52, %51, %cst_34 {dimension_numbers = #tpu.dot_dimension_numbers<[2], [1], [1], [2], [0, 0, 0, 1, 1, 2], [0], [0]>} : vector<1x8x8xbf16>, vector<1x8x128xbf16>, vector<1x8x128xf32> -> vector<1x8x128xf32>
      "tpu.trace_stop"() : () -> ()
      %54 = vector.broadcast %14 : vector<1x8x1xf32> to vector<1x8x128xf32>
      %55 = arith.mulf %54, %30 : vector<1x8x128xf32>
      %cst_35 = arith.constant 1.000000e+00 : f32
      %56 = vector.broadcast %cst_35 : f32 to vector<1x8x1xf32>
      %57 = arith.subf %56, %14 : vector<1x8x1xf32>
      %58 = vector.broadcast %57 : vector<1x8x1xf32> to vector<1x8x128xf32>
      %59 = arith.mulf %58, %42 : vector<1x8x128xf32>
      %60 = arith.addf %55, %59 : vector<1x8x128xf32>
      %61 = vector.broadcast %15 : vector<1x8x1xf32> to vector<1x8x128xf32>
      %62 = arith.mulf %61, %60 : vector<1x8x128xf32>
      %63 = arith.addf %62, %53 : vector<1x8x128xf32>
      %64 = math.log %63 : vector<1x8x128xf32>
      %cst_36 = arith.constant -3.000000e+02 : f32
      %65 = vector.broadcast %cst_36 : f32 to vector<1x8x128xf32>
      %66 = arith.maximumf %64, %65 : vector<1x8x128xf32>
      %c0_37 = arith.constant 0 : index
      %c0_38 = arith.constant 0 : index
      %c0_39 = arith.constant 0 : index
      %67 = vector.load %arg15[%c0_37, %c0_38, %c0_39] : memref<1x8x128xf32, #tpu.memory_space<vmem>>, vector<1x8x128xf32>
      tpu.vector_store %arg15[%c0_37, %c0_38, %c0_39], %66 {strides = array<i32>} : memref<1x8x128xf32, #tpu.memory_space<vmem>>, vector<1x8x128xf32>,
      %c128_i32_40 = arith.constant 128 : i32
      %68 = arith.muli %arg2, %c128_i32_40 : i32
      %c256_i32_41 = arith.constant 256 : i32
      %69 = arith.cmpi slt, %68, %c256_i32_41 : i32
      %70 = arith.extui %69 : i1 to i32
      %c0_i32_42 = arith.constant 0 : i32
      %71 = arith.cmpi ne, %70, %c0_i32_42 : i32
      scf.if %71 {
        %72 = math.log %60 : vector<1x8x128xf32>
        %c0_43 = arith.constant 0 : index
        %c0_44 = arith.constant 0 : index
        %c0_45 = arith.constant 0 : index
        %73 = vector.load %arg16[%c0_43, %c0_44, %c0_45] : memref<1x8x128xf32, #tpu.memory_space<vmem>>, vector<1x8x128xf32>
        tpu.vector_store %arg16[%c0_43, %c0_44, %c0_45], %72 {strides = array<i32>} : memref<1x8x128xf32, #tpu.memory_space<vmem>>, vector<1x8x128xf32>,
      } else {
      }
    } else {
    }
    return
  }
  func.func @transform_0(%arg0: i32, %arg1: i32, %arg2: i32) -> (i32, i32, i32) {
    %c0_i32 = arith.constant 0 : i32
    %c0_i32_0 = arith.constant 0 : i32
    %c0_i32_1 = arith.constant 0 : i32
    return %arg0, %c0_i32, %c0_i32_0 : i32, i32, i32
  }
  func.func @transform_1(%arg0: i32, %arg1: i32, %arg2: i32) -> (i32, i32, i32) {
    %c0_i32 = arith.constant 0 : i32
    %c0_i32_0 = arith.constant 0 : i32
    %c0_i32_1 = arith.constant 0 : i32
    return %arg0, %c0_i32, %c0_i32_0 : i32, i32, i32
  }
  func.func @transform_2(%arg0: i32, %arg1: i32, %arg2: i32) -> (i32, i32, i32, i32) {
    %c0_i32 = arith.constant 0 : i32
    %c0_i32_0 = arith.constant 0 : i32
    %c0_i32_1 = arith.constant 0 : i32
    %c0_i32_2 = arith.constant 0 : i32
    return %arg0, %c0_i32, %c0_i32_0, %c0_i32_1 : i32, i32, i32, i32
  }
  func.func @transform_3(%arg0: i32, %arg1: i32, %arg2: i32) -> (i32, i32, i32) {
    %c0_i32 = arith.constant 0 : i32
    %c0_i32_0 = arith.constant 0 : i32
    %c0_i32_1 = arith.constant 0 : i32
    return %arg0, %c0_i32, %c0_i32_0 : i32, i32, i32
  }
  func.func @transform_4(%arg0: i32, %arg1: i32, %arg2: i32) -> (i32, i32, i32) {
    %c0_i32 = arith.constant 0 : i32
    %c0_i32_0 = arith.constant 0 : i32
    %c0_i32_1 = arith.constant 0 : i32
    return %arg0, %c0_i32, %c0_i32_0 : i32, i32, i32
  }
  func.func @transform_5(%arg0: i32, %arg1: i32, %arg2: i32) -> (i32, i32, i32, i32) {
    %c0_i32 = arith.constant 0 : i32
    %c0_i32_0 = arith.constant 0 : i32
    %c0_i32_1 = arith.constant 0 : i32
    %c0_i32_2 = arith.constant 0 : i32
    return %arg0, %c0_i32, %c0_i32_0, %c0_i32_1 : i32, i32, i32, i32
  }
  func.func @transform_6(%arg0: i32, %arg1: i32, %arg2: i32) -> (i32, i32, i32) {
    %c0_i32 = arith.constant 0 : i32
    %c0_i32_0 = arith.constant 0 : i32
    %c0_i32_1 = arith.constant 0 : i32
    return %arg0, %c0_i32, %c0_i32_0 : i32, i32, i32
  }
  func.func @transform_7(%arg0: i32, %arg1: i32, %arg2: i32) -> (i32, i32) {
    %c0_i32 = arith.constant 0 : i32
    %c0_i32_0 = arith.constant 0 : i32
    return %c0_i32, %arg2 : i32, i32
  }
  func.func @transform_8(%arg0: i32, %arg1: i32, %arg2: i32) -> (i32, i32) {
    %c0_i32 = arith.constant 0 : i32
    %c0_i32_0 = arith.constant 0 : i32
    return %c0_i32, %arg2 : i32, i32
  }
  func.func @transform_9(%arg0: i32, %arg1: i32, %arg2: i32) -> (i32, i32) {
    %c0_i32 = arith.constant 0 : i32
    %c0_i32_0 = arith.constant 0 : i32
    %c0_i32_1 = arith.constant 0 : i32
    return %c0_i32, %c0_i32_0 : i32, i32
  }
  func.func @transform_10(%arg0: i32, %arg1: i32, %arg2: i32) -> (i32, i32) {
    %c0_i32 = arith.constant 0 : i32
    %c0_i32_0 = arith.constant 0 : i32
    %c0_i32_1 = arith.constant 0 : i32
    return %c0_i32, %c0_i32_0 : i32, i32
  }
  func.func @transform_11(%arg0: i32, %arg1: i32, %arg2: i32) -> i32 {
    %c0_i32 = arith.constant 0 : i32
    %c0_i32_0 = arith.constant 0 : i32
    return %c0_i32 : i32
  }
  func.func @transform_12(%arg0: i32, %arg1: i32, %arg2: i32) -> (i32, i32, i32) {
    %0 = arith.muli %arg2, %arg1 : i32
    %c0_i32 = arith.constant 0 : i32
    %c0_i32_0 = arith.constant 0 : i32
    return %arg0, %c0_i32, %0 : i32, i32, i32
  }
  func.func @transform_13(%arg0: i32, %arg1: i32, %arg2: i32) -> (i32, i32, i32) {
    %c1_i32 = arith.constant 1 : i32
    %0 = arith.minsi %arg2, %c1_i32 : i32
    %1 = arith.muli %0, %arg1 : i32
    %c0_i32 = arith.constant 0 : i32
    %c0_i32_0 = arith.constant 0 : i32
    return %arg0, %c0_i32, %1 : i32, i32, i32
  }
}

</mosaic_0001>

<llo_original>
// kernel: tpu_custom_call.1
$region0: #{tpu_custom_call.1}
  #allocation0 [shape = 'u32[]', space=smem, size = 0x4, offset = 0x4, fixed_abs, tag = 'smem constant byte address 0x4 - core index']
  #allocation1 [shape = 'u32[72,128]{1,0:T(1,128)}', space=vmem, size = 0x9000, scoped, tag = 'internal scratch']
  #allocation2 [shape = 'f32[8,1]{1,0:T(8,128)}', space=vmem, size = 0x1000, scoped, tag = 'scratch operand']
  #allocation3 [shape = 'f32[8,1]{1,0:T(8,128)}', space=vmem, size = 0x1000, scoped, tag = 'scratch operand']
  #allocation4 [shape = 'f32[1,8,1]{2,1,0:T(8,128)}', space=vmem, size = 0x1000, scoped, tag = 'scratch operand']
  #allocation5 [shape = 'f32[1,8,1]{2,1,0:T(8,128)}', space=vmem, size = 0x1000, scoped, tag = 'scratch operand']
  #allocation6 [shape = 'bf16[1,8,16]{2,1,0:T(8,128)(2,1)}', space=vmem, size = 0x800, scoped, tag = 'scratch operand']
  #allocation7 [shape = 'bf16[1,8,8]{2,1,0:T(8,128)(2,1)}', space=vmem, size = 0x800, scoped, tag = 'scratch operand']
  #allocation8 [shape = 'bf16[8,128]{1,0:T(8,128)(2,1)}', space=vmem, size = 0x800, scoped, tag = 'scratch operand']
  %s0 = inlined_call_operand.vmem [shape: f32[2,8,128], index: 0, kind: input, shape index: {}]
  %s1 = inlined_call_operand.vmem [shape: f32[2,16,128], index: 1, kind: input, shape index: {}]
  %s2 = inlined_call_operand.hbm [shape: f32[2,4,8,16], index: 2, kind: input, shape index: {}]
  %s3 = inlined_call_operand.vmem [shape: s32[2,16,1], index: 3, kind: input, shape index: {}]
  %s4 = inlined_call_operand.hbm [shape: f32[2,8,128], index: 4, kind: input, shape index: {}]
  %s5 = inlined_call_operand.hbm [shape: f32[2,4,8,8], index: 5, kind: input, shape index: {}]
  %s6 = inlined_call_operand.vmem [shape: s32[2,8,1], index: 6, kind: input, shape index: {}]
  %s7 = inlined_call_operand.hbm [shape: bf16[128,384], index: 7, kind: input, shape index: {}]
  %s8 = inlined_call_operand.vmem [shape: f32[1,384], index: 8, kind: input, shape index: {}]
  %s9 = inlined_call_operand.vmem [shape: f32[1,256], index: 9, kind: input, shape index: {}]
  %s10 = inlined_call_operand.vmem [shape: f32[1,384], index: 10, kind: input, shape index: {}]
  %s11 = inlined_call_operand.vmem [shape: f32[2], index: 11, kind: input, shape index: {}]
  %s12 = inlined_call_operand.hbm [shape: f32[2,8,384], index: 12, kind: output, shape index: {0}]
  %s13 = inlined_call_operand.hbm [shape: f32[2,8,256], index: 13, kind: output, shape index: {1}]
  %14 = xla_tuple %s12, %s13
  %s15 = sld [smem:[#allocation0]]
  $region125: #{tpu_custom_call.1} parent=0
    _
  %s17 = ssub.s32 1, %s15
  %s18 = scalar_select 0, %s17, %s15
  $region1: #{tpu_custom_call.1} parent=0
    #allocation9 [shape = 'u8[32768]{0}', space=vmem, size = 0x8000, scoped, tag = 'input window, operand 2']
    #allocation10 [shape = 's32[2]{0}', space=sflag, size = 0x8, scoped, tag = 'scoped memory for tpu_custom_call.1']
    #allocation11 [shape = 's32[2]{0}', space=sflag, size = 0x8, scoped, tag = 'scoped memory for tpu_custom_call.1']
    #allocation12 [shape = 's32[2]{0}', space=sflag, size = 0x8, scoped, tag = 'scoped memory for tpu_custom_call.1']
    #allocation13 [shape = 'u8[8192]{0}', space=vmem, size = 0x2000, scoped, tag = 'input window, operand 4']
    #allocation14 [shape = 's32[2]{0}', space=sflag, size = 0x8, scoped, tag = 'scoped memory for tpu_custom_call.1']
    #allocation15 [shape = 'u8[32768]{0}', space=vmem, size = 0x8000, scoped, tag = 'input window, operand 5']
    #allocation16 [shape = 'u8[65536]{0}', space=vmem, size = 0x10000, scoped, tag = 'input window, operand 7']
    #allocation17 [shape = 's32[2]{0}', space=sflag, size = 0x8, scoped, tag = 'scoped memory for tpu_custom_call.1']
    #allocation18 [shape = 'u8[512]{0}', space=smem, size = 0x200, scoped, tag = 'input window, operand 11, single buffered']
    #allocation19 [shape = 'u8[8192]{0}', space=vmem, size = 0x2000, scoped, tag = 'output window, operand 0']
    #allocation20 [shape = 'u8[8192]{0}', space=vmem, size = 0x2000, scoped, tag = 'output window, operand 1']
    #allocation21 [shape = 's32[2]{0}', space=sflag, size = 0x8, scoped, tag = 'scoped memory for tpu_custom_call.1']
    %19 = vsyncpa [#allocation10], 0
    %s20 = scalar_lea.sflag [#allocation10], 1
    %21 = vsyncpa %s20, 0
    %22 = vsyncpa [#allocation14], 0
    %s23 = scalar_lea.sflag [#allocation14], 1
    %24 = vsyncpa %s23, 0
    %25 = vsyncpa [#allocation17], 0
    %s26 = scalar_lea.sflag [#allocation17], 1
    %27 = vsyncpa %s26, 0
    %28 = vsyncpa [#allocation12], 0
    %29 = vsyncpa [#allocation11], 0
    %s30 = scalar_lea.sflag [#allocation11], 1
    %31 = vsyncpa %s30, 0
    %32 = vsyncpa [#allocation21], 0
    %s33 = scalar_lea.sflag [#allocation21], 1
    %34 = vsyncpa %s33, 0
    loop: start=0, step=1, limit=14
    $region2: #{tpu_custom_call.1} parent=1 // loop_pre_header
      _
    $region3: #{tpu_custom_call.1} parent=1 // loop_header
      %s36 = sphi 0, %s40
      %p37 = scmp.ge.s32.totalorder %s36, 14
      %s43 = sphi 0, %s62
      %s44 = sphi 0, %s58
      %s45 = sphi 0, %s54
      %s46 = sphi 0, %s43
      %s47 = sphi 0, %s44
      %s48 = sphi 0, %s45
      %s49 = sphi 0, %s46
      %s50 = sphi 0, %s47
      %s51 = sphi 0, %s48
      %s65 = sphi 0, %s67
      %s68 = sphi 0, %s65
      %s69 = sphi 0, %s68
      %s85 = sphi 0, %s69
      %s91 = sphi 0, %s93
      %s94 = sphi 0, %s91
      %s95 = sphi 0, %s94
      %s111 = sphi 0, %s95
      %s117 = sphi 0, %s119
      %s120 = sphi 0, %s117
      %s121 = sphi 0, %s120
      %s137 = sphi 0, %s121
      %s143 = sphi 0, %s145
      %s146 = sphi 0, %s143
      %s147 = sphi 0, %s146
      %s163 = sphi 0, %s147
      %s169 = sphi 0, %s171
      %s172 = sphi 0, %s169
      %s173 = sphi 0, %s172
      %s189 = sphi 0, %s173
      %s195 = sphi 0, %s197
      %s198 = sphi 0, %s195
      %s199 = sphi 0, %s198
      %s215 = sphi 0, %s199
      %s221 = sphi 0, %s223
      %s224 = sphi 0, %s221
      %s225 = sphi 0, %s224
      %s241 = sphi 0, %s225
      %s247 = sphi 0, %s249
      %s250 = sphi 0, %s247
      %s251 = sphi 0, %s250
      %s267 = sphi 0, %s251
      %s273 = sphi 0, %s275
      %s276 = sphi 0, %s273
      %s277 = sphi 0, %s276
      %s293 = sphi 0, %s277
      %s297 = sphi 0, %s297
      %s299 = sphi 0, %s297
      %s300 = sphi 0, %s299
      %s314 = sphi 0, %s300
      %s318 = sphi 0, %s318
      %s320 = sphi 0, %s318
      %s321 = sphi 0, %s320
      %s335 = sphi 0, %s321
      %s339 = sphi 0, %s339
      %s341 = sphi 0, %s339
      %s342 = sphi 0, %s341
      %s356 = sphi 0, %s342
      %s366 = sphi 0, %s368
      %s369 = sphi 0, %s366
      %s370 = sphi 0, %s369
      %s386 = sphi 0, %s370
      %s400 = sphi 0, %s402
      %s403 = sphi 0, %s400
      %s404 = sphi 0, %s403
      %s420 = sphi 0, %s404
    $region4: #{tpu_custom_call.1} parent=1 // loop_header_branch
      %39 = sbr.rel (%p37) target = $region8
    $region5: #{tpu_custom_call.1} parent=1 // loop_body
      %s41 = ssub.s32 %s36, 1
      %s42 = ssub.s32 %s36, 2
      %s52 = sadd.s32 1, %s45
      %p53 = scmp.ge.s32.totalorder %s52, 3
      %s54 = scalar_select %p53, 0, %s52
      %s55 = sadd.s32 1, %s44
      %s56 = scalar_select %p53, %s55, %s44
      %p57 = scmp.ge.s32.totalorder %s56, 2
      %s58 = scalar_select %p57, 0, %s56
      %s59 = sadd.s32 1, %s43
      %s60 = scalar_select %p57, %s59, %s43
      %p61 = scmp.ge.s32.totalorder %s60, 2
      %s62 = scalar_select %p61, 0, %s60
      %s63 = ssub.s32 %s43, %s62
      %p64 = scmp.eq.s32.totalorder %s63, 0
      %s66 = sadd.s32 %s65, 1
      %s67 = scalar_select %p64, %s65, %s66
      %p70 = pneg %p64
      %p71 = scmp.eq.s32.totalorder %s36, 11
      %p72 = por %p70, %p71
      %p73 = scmp.ne.s32.totalorder %s65, %s68
      %p74 = scmp.eq.s32.totalorder %s36, 0
      %p75 = por %p73, %p74
      %p76 = scmp.ne.s32.totalorder %s65, %s68
      %p77 = scmp.eq.s32.totalorder %s41, 11
      %p78 = por %p76, %p77
      %p79 = scmp.ne.s32.totalorder %s68, %s69
      %p80 = scmp.eq.s32.totalorder %s41, 0
      %p81 = por %p79, %p80
      %p82 = scmp.ne.s32.totalorder %s68, %s69
      %p83 = scmp.eq.s32.totalorder %s42, 11
      %p84 = por %p82, %p83
      %p86 = scmp.ne.s32.totalorder %s69, %s85
      %p87 = scmp.eq.s32.totalorder %s42, 0
      %p88 = por %p86, %p87
      %s89 = ssub.s32 %s43, %s62
      %p90 = scmp.eq.s32.totalorder %s89, 0
      %s92 = sadd.s32 %s91, 1
      %s93 = scalar_select %p90, %s91, %s92
      %p96 = pneg %p90
      %p97 = scmp.eq.s32.totalorder %s36, 11
      %p98 = por %p96, %p97
      %p99 = scmp.ne.s32.totalorder %s91, %s94
      %p100 = scmp.eq.s32.totalorder %s36, 0
      %p101 = por %p99, %p100
      %p102 = scmp.ne.s32.totalorder %s91, %s94
      %p103 = scmp.eq.s32.totalorder %s41, 11
      %p104 = por %p102, %p103
      %p105 = scmp.ne.s32.totalorder %s94, %s95
      %p106 = scmp.eq.s32.totalorder %s41, 0
      %p107 = por %p105, %p106
      %p108 = scmp.ne.s32.totalorder %s94, %s95
      %p109 = scmp.eq.s32.totalorder %s42, 11
      %p110 = por %p108, %p109
      %p112 = scmp.ne.s32.totalorder %s95, %s111
      %p113 = scmp.eq.s32.totalorder %s42, 0
      %p114 = por %p112, %p113
      %s115 = ssub.s32 %s43, %s62
      %p116 = scmp.eq.s32.totalorder %s115, 0
      %s118 = sadd.s32 %s117, 1
      %s119 = scalar_select %p116, %s117, %s118
      %p122 = pneg %p116
      %p123 = scmp.eq.s32.totalorder %s36, 11
      %p124 = por %p122, %p123
      %p125 = scmp.ne.s32.totalorder %s117, %s120
      %p126 = scmp.eq.s32.totalorder %s36, 0
      %p127 = por %p125, %p126
      %p128 = scmp.ne.s32.totalorder %s117, %s120
      %p129 = scmp.eq.s32.totalorder %s41, 11
      %p130 = por %p128, %p129
      %p131 = scmp.ne.s32.totalorder %s120, %s121
      %p132 = scmp.eq.s32.totalorder %s41, 0
      %p133 = por %p131, %p132
      %p134 = scmp.ne.s32.totalorder %s120, %s121
      %p135 = scmp.eq.s32.totalorder %s42, 11
      %p136 = por %p134, %p135
      %p138 = scmp.ne.s32.totalorder %s121, %s137
      %p139 = scmp.eq.s32.totalorder %s42, 0
      %p140 = por %p138, %p139
      %s141 = ssub.s32 %s43, %s62
      %p142 = scmp.eq.s32.totalorder %s141, 0
      %s144 = sadd.s32 %s143, 1
      %s145 = scalar_select %p142, %s143, %s144
      %p148 = pneg %p142
      %p149 = scmp.eq.s32.totalorder %s36, 11
      %p150 = por %p148, %p149
      %p151 = scmp.ne.s32.totalorder %s143, %s146
      %p152 = scmp.eq.s32.totalorder %s36, 0
      %p153 = por %p151, %p152
      %p154 = scmp.ne.s32.totalorder %s143, %s146
      %p155 = scmp.eq.s32.totalorder %s41, 11
      %p156 = por %p154, %p155
      %p157 = scmp.ne.s32.totalorder %s146, %s147
      %p158 = scmp.eq.s32.totalorder %s41, 0
      %p159 = por %p157, %p158
      %p160 = scmp.ne.s32.totalorder %s146, %s147
      %p161 = scmp.eq.s32.totalorder %s42, 11
      %p162 = por %p160, %p161
      %p164 = scmp.ne.s32.totalorder %s147, %s163
      %p165 = scmp.eq.s32.totalorder %s42, 0
      %p166 = por %p164, %p165
      %s167 = ssub.s32 %s43, %s62
      %p168 = scmp.eq.s32.totalorder %s167, 0
      %s170 = sadd.s32 %s169, 1
      %s171 = scalar_select %p168, %s169, %s170
      %p174 = pneg %p168
      %p175 = scmp.eq.s32.totalorder %s36, 11
      %p176 = por %p174, %p175
      %p177 = scmp.ne.s32.totalorder %s169, %s172
      %p178 = scmp.eq.s32.totalorder %s36, 0
      %p179 = por %p177, %p178
      %p180 = scmp.ne.s32.totalorder %s169, %s172
      %p181 = scmp.eq.s32.totalorder %s41, 11
      %p182 = por %p180, %p181
      %p183 = scmp.ne.s32.totalorder %s172, %s173
      %p184 = scmp.eq.s32.totalorder %s41, 0
      %p185 = por %p183, %p184
      %p186 = scmp.ne.s32.totalorder %s172, %s173
      %p187 = scmp.eq.s32.totalorder %s42, 11
      %p188 = por %p186, %p187
      %p190 = scmp.ne.s32.totalorder %s173, %s189
      %p191 = scmp.eq.s32.totalorder %s42, 0
      %p192 = por %p190, %p191
      %s193 = ssub.s32 %s43, %s62
      %p194 = scmp.eq.s32.totalorder %s193, 0
      %s196 = sadd.s32 %s195, 1
      %s197 = scalar_select %p194, %s195, %s196
      %p200 = pneg %p194
      %p201 = scmp.eq.s32.totalorder %s36, 11
      %p202 = por %p200, %p201
      %p203 = scmp.ne.s32.totalorder %s195, %s198
      %p204 = scmp.eq.s32.totalorder %s36, 0
      %p205 = por %p203, %p204
      %p206 = scmp.ne.s32.totalorder %s195, %s198
      %p207 = scmp.eq.s32.totalorder %s41, 11
      %p208 = por %p206, %p207
      %p209 = scmp.ne.s32.totalorder %s198, %s199
      %p210 = scmp.eq.s32.totalorder %s41, 0
      %p211 = por %p209, %p210
      %p212 = scmp.ne.s32.totalorder %s198, %s199
      %p213 = scmp.eq.s32.totalorder %s42, 11
      %p214 = por %p212, %p213
      %p216 = scmp.ne.s32.totalorder %s199, %s215
      %p217 = scmp.eq.s32.totalorder %s42, 0
      %p218 = por %p216, %p217
      %s219 = ssub.s32 %s43, %s62
      %p220 = scmp.eq.s32.totalorder %s219, 0
      %s222 = sadd.s32 %s221, 1
      %s223 = scalar_select %p220, %s221, %s222
      %p226 = pneg %p220
      %p227 = scmp.eq.s32.totalorder %s36, 11
      %p228 = por %p226, %p227
      %p229 = scmp.ne.s32.totalorder %s221, %s224
      %p230 = scmp.eq.s32.totalorder %s36, 0
      %p231 = por %p229, %p230
      %p232 = scmp.ne.s32.totalorder %s221, %s224
      %p233 = scmp.eq.s32.totalorder %s41, 11
      %p234 = por %p232, %p233
      %p235 = scmp.ne.s32.totalorder %s224, %s225
      %p236 = scmp.eq.s32.totalorder %s41, 0
      %p237 = por %p235, %p236
      %p238 = scmp.ne.s32.totalorder %s224, %s225
      %p239 = scmp.eq.s32.totalorder %s42, 11
      %p240 = por %p238, %p239
      %p242 = scmp.ne.s32.totalorder %s225, %s241
      %p243 = scmp.eq.s32.totalorder %s42, 0
      %p244 = por %p242, %p243
      %s245 = ssub.s32 %s45, %s54
      %p246 = scmp.eq.s32.totalorder %s245, 0
      %s248 = sadd.s32 %s247, 1
      %s249 = scalar_select %p246, %s247, %s248
      %p252 = pneg %p246
      %p253 = scmp.eq.s32.totalorder %s36, 11
      %p254 = por %p252, %p253
      %p255 = scmp.ne.s32.totalorder %s247, %s250
      %p256 = scmp.eq.s32.totalorder %s36, 0
      %p257 = por %p255, %p256
      %p258 = scmp.ne.s32.totalorder %s247, %s250
      %p259 = scmp.eq.s32.totalorder %s41, 11
      %p260 = por %p258, %p259
      %p261 = scmp.ne.s32.totalorder %s250, %s251
      %p262 = scmp.eq.s32.totalorder %s41, 0
      %p263 = por %p261, %p262
      %p264 = scmp.ne.s32.totalorder %s250, %s251
      %p265 = scmp.eq.s32.totalorder %s42, 11
      %p266 = por %p264, %p265
      %p268 = scmp.ne.s32.totalorder %s251, %s267
      %p269 = scmp.eq.s32.totalorder %s42, 0
      %p270 = por %p268, %p269
      %s271 = ssub.s32 %s45, %s54
      %p272 = scmp.eq.s32.totalorder %s271, 0
      %s274 = sadd.s32 %s273, 1
      %s275 = scalar_select %p272, %s273, %s274
      %p278 = pneg %p272
      %p279 = scmp.eq.s32.totalorder %s36, 11
      %p280 = por %p278, %p279
      %p281 = scmp.ne.s32.totalorder %s273, %s276
      %p282 = scmp.eq.s32.totalorder %s36, 0
      %p283 = por %p281, %p282
      %p284 = scmp.ne.s32.totalorder %s273, %s276
      %p285 = scmp.eq.s32.totalorder %s41, 11
      %p286 = por %p284, %p285
      %p287 = scmp.ne.s32.totalorder %s276, %s277
      %p288 = scmp.eq.s32.totalorder %s41, 0
      %p289 = por %p287, %p288
      %p290 = scmp.ne.s32.totalorder %s276, %s277
      %p291 = scmp.eq.s32.totalorder %s42, 11
      %p292 = por %p290, %p291
      %p294 = scmp.ne.s32.totalorder %s277, %s293
      %p295 = scmp.eq.s32.totalorder %s42, 0
      %p296 = por %p294, %p295
      %s298 = sadd.s32 %s297, 1
      %p301 = scmp.eq.s32.totalorder %s36, 11
      %p302 = scmp.ne.s32.totalorder %s297, %s299
      %p303 = scmp.eq.s32.totalorder %s36, 0
      %p304 = por %p302, %p303
      %p305 = scmp.ne.s32.totalorder %s297, %s299
      %p306 = scmp.eq.s32.totalorder %s41, 11
      %p307 = por %p305, %p306
      %p308 = scmp.ne.s32.totalorder %s299, %s300
      %p309 = scmp.eq.s32.totalorder %s41, 0
      %p310 = por %p308, %p309
      %p311 = scmp.ne.s32.totalorder %s299, %s300
      %p312 = scmp.eq.s32.totalorder %s42, 11
      %p313 = por %p311, %p312
      %p315 = scmp.ne.s32.totalorder %s300, %s314
      %p316 = scmp.eq.s32.totalorder %s42, 0
      %p317 = por %p315, %p316
      %s319 = sadd.s32 %s318, 1
      %p322 = scmp.eq.s32.totalorder %s36, 11
      %p323 = scmp.ne.s32.totalorder %s318, %s320
      %p324 = scmp.eq.s32.totalorder %s36, 0
      %p325 = por %p323, %p324
      %p326 = scmp.ne.s32.totalorder %s318, %s320
      %p327 = scmp.eq.s32.totalorder %s41, 11
      %p328 = por %p326, %p327
      %p329 = scmp.ne.s32.totalorder %s320, %s321
      %p330 = scmp.eq.s32.totalorder %s41, 0
      %p331 = por %p329, %p330
      %p332 = scmp.ne.s32.totalorder %s320, %s321
      %p333 = scmp.eq.s32.totalorder %s42, 11
      %p334 = por %p332, %p333
      %p336 = scmp.ne.s32.totalorder %s321, %s335
      %p337 = scmp.eq.s32.totalorder %s42, 0
      %p338 = por %p336, %p337
      %s340 = sadd.s32 %s339, 1
      %p343 = scmp.eq.s32.totalorder %s36, 11
      %p344 = scmp.ne.s32.totalorder %s339, %s341
      %p345 = scmp.eq.s32.totalorder %s36, 0
      %p346 = por %p344, %p345
      %p347 = scmp.ne.s32.totalorder %s339, %s341
      %p348 = scmp.eq.s32.totalorder %s41, 11
      %p349 = por %p347, %p348
      %p350 = scmp.ne.s32.totalorder %s341, %s342
      %p351 = scmp.eq.s32.totalorder %s41, 0
      %p352 = por %p350, %p351
      %p353 = scmp.ne.s32.totalorder %s341, %s342
      %p354 = scmp.eq.s32.totalorder %s42, 11
      %p355 = por %p353, %p354
      %p357 = scmp.ne.s32.totalorder %s342, %s356
      %p358 = scmp.eq.s32.totalorder %s42, 0
      %p359 = por %p357, %p358
      %s360 = smul.u32 %s45, %s44
      %s361 = smul.u32 %s54, %s58
      %s362 = ssub.s32 %s43, %s62
      %s363 = ssub.s32 %s360, %s361
      %s364 = sor.u32 %s362, %s363
      %p365 = scmp.eq.s32.totalorder %s364, 0
      %s367 = sadd.s32 %s366, 1
      %s368 = scalar_select %p365, %s366, %s367
      %p371 = pneg %p365
      %p372 = scmp.eq.s32.totalorder %s36, 11
      %p373 = por %p371, %p372
      %p374 = scmp.ne.s32.totalorder %s366, %s369
      %p375 = scmp.eq.s32.totalorder %s36, 0
      %p376 = por %p374, %p375
      %p377 = scmp.ne.s32.totalorder %s366, %s369
      %p378 = scmp.eq.s32.totalorder %s41, 11
      %p379 = por %p377, %p378
      %p380 = scmp.ne.s32.totalorder %s369, %s370
      %p381 = scmp.eq.s32.totalorder %s41, 0
      %p382 = por %p380, %p381
      %p383 = scmp.ne.s32.totalorder %s369, %s370
      %p384 = scmp.eq.s32.totalorder %s42, 11
      %p385 = por %p383, %p384
      %p387 = scmp.ne.s32.totalorder %s370, %s386
      %p388 = scmp.eq.s32.totalorder %s42, 0
      %p389 = por %p387, %p388
      %p390 = scmp.lt.s32.totalorder %s45, 1
      %s391 = scalar_select %p390, %s45, 1
      %s392 = smul.u32 %s391, %s44
      %p393 = scmp.lt.s32.totalorder %s54, 1
      %s394 = scalar_select %p393, %s54, 1
      %s395 = smul.u32 %s394, %s58
      %s396 = ssub.s32 %s43, %s62
      %s397 = ssub.s32 %s392, %s395
      %s398 = sor.u32 %s396, %s397
      %p399 = scmp.eq.s32.totalorder %s398, 0
      %s401 = sadd.s32 %s400, 1
      %s402 = scalar_select %p399, %s400, %s401
      %p405 = pneg %p399
      %p406 = scmp.eq.s32.totalorder %s36, 11
      %p407 = por %p405, %p406
      %p408 = scmp.ne.s32.totalorder %s400, %s403
      %p409 = scmp.eq.s32.totalorder %s36, 0
      %p410 = por %p408, %p409
      %p411 = scmp.ne.s32.totalorder %s400, %s403
      %p412 = scmp.eq.s32.totalorder %s41, 11
      %p413 = por %p411, %p412
      %p414 = scmp.ne.s32.totalorder %s403, %s404
      %p415 = scmp.eq.s32.totalorder %s41, 0
      %p416 = por %p414, %p415
      %p417 = scmp.ne.s32.totalorder %s403, %s404
      %p418 = scmp.eq.s32.totalorder %s42, 11
      %p419 = por %p417, %p418
      %p421 = scmp.ne.s32.totalorder %s404, %s420
      %p422 = scmp.eq.s32.totalorder %s42, 0
      %p423 = por %p421, %p422
      %p424 = scmp.le.s32.totalorder 1, %s36
      %p425 = scmp.lt.s32.totalorder %s36, 13
      %p426 = pnand %p424, %p425
      %p427 = pneg %p426
      // Predicated region
      $region9: #{tpu_custom_call.1} parent=5 // pred_check
        _
      $region10: #{tpu_custom_call.1} parent=5 // pred_check_branch
        %429 = sbr.rel (%p426) target = $region12
      $region11: #{tpu_custom_call.1} parent=5 // pred_region
        %s430 = ssub.s32 %s36, 1
        // Predicated region
        $region13: #{tpu_custom_call.1} parent=11 // pred_check
          %p431 = pneg %p310
        $region14: #{tpu_custom_call.1} parent=11 // pred_check_branch
          %433 = sbr.rel (%p431) target = $region16
        $region15: #{tpu_custom_call.1} parent=11 // pred_region
          _
        $region16: #{tpu_custom_call.1} parent=11 // pred_fallthru
          _
        // Predicated region
        $region17: #{tpu_custom_call.1} parent=11 // pred_check
          %p434 = pneg %p331
        $region18: #{tpu_custom_call.1} parent=11 // pred_check_branch
          %436 = sbr.rel (%p434) target = $region20
        $region19: #{tpu_custom_call.1} parent=11 // pred_region
          _
        $region20: #{tpu_custom_call.1} parent=11 // pred_fallthru
          _
        // Predicated region
        $region21: #{tpu_custom_call.1} parent=11 // pred_check
          %p437 = pneg %p352
        $region22: #{tpu_custom_call.1} parent=11 // pred_check_branch
          %439 = sbr.rel (%p437) target = $region24
        $region23: #{tpu_custom_call.1} parent=11 // pred_region
          %441 = vsyncadd [#allocation12], 0
          %s443 = sshll.u32 %s11, 4
          %s444 = int_to_ptr.vmem [resolvable:$true] %s443
          %446 = dma.vmem_to_smem %s444, 16, [#allocation18], [#allocation12]
        $region24: #{tpu_custom_call.1} parent=11 // pred_fallthru
          _
      $region12: #{tpu_custom_call.1} parent=5 // pred_fallthru
        _
      %p447 = scmp.lt.s32.totalorder %s36, 12
      // Predicated region
      $region25: #{tpu_custom_call.1} parent=5 // pred_check
        %p448 = pneg %p447
      $region26: #{tpu_custom_call.1} parent=5 // pred_check_branch
        %450 = sbr.rel (%p448) target = $region28
      $region27: #{tpu_custom_call.1} parent=5 // pred_region
        // Predicated region
        $region29: #{tpu_custom_call.1} parent=27 // pred_check
          %p451 = pneg %p75
        $region30: #{tpu_custom_call.1} parent=27 // pred_check_branch
          %453 = sbr.rel (%p451) target = $region32
        $region31: #{tpu_custom_call.1} parent=27 // pred_region
          %p454 = scmp.lt.s32.totalorder %s43, 1
          %s455 = scalar_select %p454, %s43, 1
          %s456 = smul.addr %s455, 8
          %s457 = scalar_lea.vmem %s0, %s456
        $region32: #{tpu_custom_call.1} parent=27 // pred_fallthru
          _
        // Predicated region
        $region33: #{tpu_custom_call.1} parent=27 // pred_check
          %p458 = pneg %p101
        $region34: #{tpu_custom_call.1} parent=27 // pred_check_branch
          %460 = sbr.rel (%p458) target = $region36
        $region35: #{tpu_custom_call.1} parent=27 // pred_region
          %p461 = scmp.lt.s32.totalorder %s43, 1
          %s462 = scalar_select %p461, %s43, 1
          %s463 = smul.addr %s462, 2
          %s464 = smul.addr %s463, 8
          %s465 = scalar_lea.vmem %s1, %s464
        $region36: #{tpu_custom_call.1} parent=27 // pred_fallthru
          _
        // Predicated region
        $region37: #{tpu_custom_call.1} parent=27 // pred_check
          %p466 = pneg %p127
        $region38: #{tpu_custom_call.1} parent=27 // pred_check_branch
          %468 = sbr.rel (%p466) target = $region40
        $region39: #{tpu_custom_call.1} parent=27 // pred_region
          %s469 = sand.u32 %s117, 1
          %s470 = scalar_lea.sflag [#allocation10], %s469
          %s471 = sand.u32 %s117, 1
          %s472 = smul.addr %s471, 32
          %s473 = scalar_lea.vmem [#allocation9], %s472
          %475 = vsyncadd %s470, 0
          %s476 = smul.addr %s43, 4
          %s477 = smul.addr %s476, 8
          %s478 = scalar_lea.hbm %s2, %s477
          %s479 = sshll.u32 %s478, 4
          %s480 = int_to_ptr.hbm [resolvable:$true] %s479
          %s481 = sshll.u32 %s473, 4
          %s482 = int_to_ptr.vmem [resolvable:$true] %s481
          %487 = dma.hbm_to_vmem [thread:$0]  %s480, 512, %s482, %s470, 128, 128, 8
        $region40: #{tpu_custom_call.1} parent=27 // pred_fallthru
          _
        // Predicated region
        $region41: #{tpu_custom_call.1} parent=27 // pred_check
          %p488 = pneg %p153
        $region42: #{tpu_custom_call.1} parent=27 // pred_check_branch
          %490 = sbr.rel (%p488) target = $region44
        $region43: #{tpu_custom_call.1} parent=27 // pred_region
          %p491 = scmp.lt.s32.totalorder %s43, 1
          %s492 = scalar_select %p491, %s43, 1
          %s493 = smul.addr %s492, 2
          %s494 = smul.addr %s493, 8
          %s495 = scalar_lea.vmem %s3, %s494
        $region44: #{tpu_custom_call.1} parent=27 // pred_fallthru
          _
        // Predicated region
        $region45: #{tpu_custom_call.1} parent=27 // pred_check
          %p496 = pneg %p179
        $region46: #{tpu_custom_call.1} parent=27 // pred_check_branch
          %498 = sbr.rel (%p496) target = $region48
        $region47: #{tpu_custom_call.1} parent=27 // pred_region
          %s499 = sand.u32 %s36, 1
          %s500 = scalar_lea.sflag [#allocation14], %s499
          %s501 = sand.u32 %s169, 1
          %s502 = smul.addr %s501, 8
          %s503 = scalar_lea.vmem [#allocation13], %s502
          %505 = vsyncadd %s500, 0
          %s506 = smul.addr %s43, 8
          %s507 = scalar_lea.hbm %s4, %s506
          %s509 = sshll.u32 %s507, 4
          %s510 = int_to_ptr.hbm [resolvable:$true] %s509
          %s511 = sshll.u32 %s503, 4
          %s512 = int_to_ptr.vmem [resolvable:$true] %s511
          %514 = dma.hbm_to_vmem [thread:$0]  %s510, 128, %s512, %s500
        $region48: #{tpu_custom_call.1} parent=27 // pred_fallthru
          _
        // Predicated region
        $region49: #{tpu_custom_call.1} parent=27 // pred_check
          %p515 = pneg %p205
        $region50: #{tpu_custom_call.1} parent=27 // pred_check_branch
          %517 = sbr.rel (%p515) target = $region52
        $region51: #{tpu_custom_call.1} parent=27 // pred_region
          %s518 = sand.u32 %s36, 1
          %s519 = scalar_lea.sflag [#allocation14], %s518
          %s520 = sand.u32 %s195, 1
          %s521 = smul.addr %s520, 32
          %s522 = scalar_lea.vmem [#allocation15], %s521
          %524 = vsyncadd %s519, 0
          %s525 = smul.addr %s43, 4
          %s526 = smul.addr %s525, 8
          %s527 = scalar_lea.hbm %s5, %s526
          %s528 = sshll.u32 %s527, 4
          %s529 = int_to_ptr.hbm [resolvable:$true] %s528
          %s530 = sshll.u32 %s522, 4
          %s531 = int_to_ptr.vmem [resolvable:$true] %s530
          %536 = dma.hbm_to_vmem [thread:$0]  %s529, 512, %s531, %s519, 128, 128, 8
        $region52: #{tpu_custom_call.1} parent=27 // pred_fallthru
          _
        // Predicated region
        $region53: #{tpu_custom_call.1} parent=27 // pred_check
          %p537 = pneg %p231
        $region54: #{tpu_custom_call.1} parent=27 // pred_check_branch
          %539 = sbr.rel (%p537) target = $region56
        $region55: #{tpu_custom_call.1} parent=27 // pred_region
          %p540 = scmp.lt.s32.totalorder %s43, 1
          %s541 = scalar_select %p540, %s43, 1
          %s542 = smul.addr %s541, 8
          %s543 = scalar_lea.vmem %s6, %s542
        $region56: #{tpu_custom_call.1} parent=27 // pred_fallthru
          _
        // Predicated region
        $region57: #{tpu_custom_call.1} parent=27 // pred_check
          %p544 = pneg %p257
        $region58: #{tpu_custom_call.1} parent=27 // pred_check_branch
          %546 = sbr.rel (%p544) target = $region60
        $region59: #{tpu_custom_call.1} parent=27 // pred_region
          %s547 = sand.u32 %s247, 1
          %s548 = scalar_lea.sflag [#allocation17], %s547
          %s549 = sand.u32 %s247, 1
          %s550 = smul.addr %s549, 64
          %s551 = scalar_lea.vmem [#allocation16], %s550
          %553 = vsyncadd %s548, 0
          %s554 = smul.addr %s45, 4
          %s555 = scalar_lea.hbm %s7, %s554
          %s556 = sshll.u32 %s555, 4
          %s557 = int_to_ptr.hbm [resolvable:$true] %s556
          %s558 = sshll.u32 %s551, 4
          %s559 = int_to_ptr.vmem [resolvable:$true] %s558
          %564 = dma.hbm_to_vmem [thread:$0]  %s557, 1024, %s559, %s548, 192, 64, 4
        $region60: #{tpu_custom_call.1} parent=27 // pred_fallthru
          _
        // Predicated region
        $region61: #{tpu_custom_call.1} parent=27 // pred_check
          %p565 = pneg %p283
        $region62: #{tpu_custom_call.1} parent=27 // pred_check_branch
          %567 = sbr.rel (%p565) target = $region64
        $region63: #{tpu_custom_call.1} parent=27 // pred_region
          %p568 = scmp.lt.s32.totalorder %s45, 2
          %s569 = scalar_select %p568, %s45, 2
          %s570 = scalar_lea.vmem %s8, %s569
        $region64: #{tpu_custom_call.1} parent=27 // pred_fallthru
          _
      $region28: #{tpu_custom_call.1} parent=5 // pred_fallthru
        _
      %p571 = scmp.le.s32.totalorder 1, %s36
      %p572 = scmp.lt.s32.totalorder %s36, 13
      %p573 = pnand %p571, %p572
      %p574 = pneg %p573
      // Predicated region
      $region65: #{tpu_custom_call.1} parent=5 // pred_check
        _
      $region66: #{tpu_custom_call.1} parent=5 // pred_check_branch
        %576 = sbr.rel (%p573) target = $region68
      $region67: #{tpu_custom_call.1} parent=5 // pred_region
        %s577 = ssub.s32 %s36, 1
        %s578 = sand.u32 %s120, 1
        %s579 = scalar_lea.sflag [#allocation10], %s578
        %s580 = sand.u32 %s120, 1
        %s581 = smul.addr %s580, 32
        %s582 = scalar_lea.vmem [#allocation9], %s581
        // Predicated region
        $region69: #{tpu_custom_call.1} parent=67 // pred_check
          %p583 = pneg %p133
        $region70: #{tpu_custom_call.1} parent=67 // pred_check_branch
          %585 = sbr.rel (%p583) target = $region72
        $region71: #{tpu_custom_call.1} parent=67 // pred_region
          %587 = dma.done %s579, 512
        $region72: #{tpu_custom_call.1} parent=67 // pred_fallthru
          _
        %s588 = sand.u32 %s41, 1
        %s589 = scalar_lea.sflag [#allocation14], %s588
        %s590 = sand.u32 %s172, 1
        %s591 = smul.addr %s590, 8
        %s592 = scalar_lea.vmem [#allocation13], %s591
        // Predicated region
        $region73: #{tpu_custom_call.1} parent=67 // pred_check
          %p593 = pneg %p185
        $region74: #{tpu_custom_call.1} parent=67 // pred_check_branch
          %595 = sbr.rel (%p593) target = $region76
        $region75: #{tpu_custom_call.1} parent=67 // pred_region
          %597 = dma.done %s589, 128
        $region76: #{tpu_custom_call.1} parent=67 // pred_fallthru
          _
        %s598 = sand.u32 %s41, 1
        %s599 = scalar_lea.sflag [#allocation14], %s598
        %s600 = sand.u32 %s198, 1
        %s601 = smul.addr %s600, 32
        %s602 = scalar_lea.vmem [#allocation15], %s601
        // Predicated region
        $region77: #{tpu_custom_call.1} parent=67 // pred_check
          %p603 = pneg %p211
        $region78: #{tpu_custom_call.1} parent=67 // pred_check_branch
          %605 = sbr.rel (%p603) target = $region80
        $region79: #{tpu_custom_call.1} parent=67 // pred_region
          %607 = dma.done %s599, 512
        $region80: #{tpu_custom_call.1} parent=67 // pred_fallthru
          _
        %s608 = sand.u32 %s250, 1
        %s609 = scalar_lea.sflag [#allocation17], %s608
        %s610 = sand.u32 %s250, 1
        %s611 = smul.addr %s610, 64
        %s612 = scalar_lea.vmem [#allocation16], %s611
        // Predicated region
        $region81: #{tpu_custom_call.1} parent=67 // pred_check
          %p613 = pneg %p263
        $region82: #{tpu_custom_call.1} parent=67 // pred_check_branch
          %615 = sbr.rel (%p613) target = $region84
        $region83: #{tpu_custom_call.1} parent=67 // pred_region
          %617 = dma.done %s609, 1024
        $region84: #{tpu_custom_call.1} parent=67 // pred_fallthru
          _
        // Predicated region
        $region85: #{tpu_custom_call.1} parent=67 // pred_check
          %p618 = pneg %p352
        $region86: #{tpu_custom_call.1} parent=67 // pred_check_branch
          %620 = sbr.rel (%p618) target = $region88
        $region87: #{tpu_custom_call.1} parent=67 // pred_region
          %622 = dma.done [#allocation12], 16
        $region88: #{tpu_custom_call.1} parent=67 // pred_fallthru
          _
        %623 = sfence
        %p624 = scmp.lt.s32.totalorder %s46, 1
        %s625 = scalar_select %p624, %s46, 1
        %s626 = smul.addr %s625, 8
        %s627 = scalar_lea.vmem %s0, %s626
        %p628 = pneg %p81
        %p629 = pneg %p78
        %p630 = scmp.lt.s32.totalorder %s46, 1
        %s631 = scalar_select %p630, %s46, 1
        %s632 = smul.addr %s631, 2
        %s633 = smul.addr %s632, 8
        %s634 = scalar_lea.vmem %s1, %s633
        %p635 = pneg %p107
        %p636 = pneg %p104
        %s637 = sand.u32 %s120, 1
        %s638 = scalar_lea.sflag [#allocation10], %s637
        %s639 = sand.u32 %s120, 1
        %s640 = smul.addr %s639, 32
        %s641 = scalar_lea.vmem [#allocation9], %s640
        %p642 = pneg %p133
        %p643 = pneg %p130
        %p644 = scmp.lt.s32.totalorder %s46, 1
        %s645 = scalar_select %p644, %s46, 1
        %s646 = smul.addr %s645, 2
        %s647 = smul.addr %s646, 8
        %s648 = scalar_lea.vmem %s3, %s647
        %p649 = pneg %p159
        %p650 = pneg %p156
        %s651 = sand.u32 %s41, 1
        %s652 = scalar_lea.sflag [#allocation14], %s651
        %s653 = sand.u32 %s172, 1
        %s654 = smul.addr %s653, 8
        %s655 = scalar_lea.vmem [#allocation13], %s654
        %p656 = pneg %p185
        %p657 = pneg %p182
        %s658 = sand.u32 %s41, 1
        %s659 = scalar_lea.sflag [#allocation14], %s658
        %s660 = sand.u32 %s198, 1
        %s661 = smul.addr %s660, 32
        %s662 = scalar_lea.vmem [#allocation15], %s661
        %p663 = pneg %p211
        %p664 = pneg %p208
        %p665 = scmp.lt.s32.totalorder %s46, 1
        %s666 = scalar_select %p665, %s46, 1
        %s667 = smul.addr %s666, 8
        %s668 = scalar_lea.vmem %s6, %s667
        %p669 = pneg %p237
        %p670 = pneg %p234
        %s671 = sand.u32 %s250, 1
        %s672 = scalar_lea.sflag [#allocation17], %s671
        %s673 = sand.u32 %s250, 1
        %s674 = smul.addr %s673, 64
        %s675 = scalar_lea.vmem [#allocation16], %s674
        %p676 = pneg %p263
        %p677 = pneg %p260
        %p678 = scmp.lt.s32.totalorder %s48, 2
        %s679 = scalar_select %p678, %s48, 2
        %s680 = scalar_lea.vmem %s8, %s679
        %p681 = pneg %p289
        %p682 = pneg %p286
        %p683 = pneg %p310
        %p684 = pneg %p307
        %p685 = pneg %p331
        %p686 = pneg %p328
        %p687 = pneg %p352
        %p688 = pneg %p349
        %p689 = pneg %p382
        %p690 = pneg %p379
        %s691 = sand.u32 %s369, 1
        %s692 = scalar_lea.sflag [#allocation11], %s691
        %s693 = sand.u32 %s369, 1
        %s694 = smul.addr %s693, 8
        %s695 = scalar_lea.vmem [#allocation19], %s694
        %p696 = pneg %p416
        %p697 = pneg %p413
        %s698 = sand.u32 %s403, 1
        %s699 = scalar_lea.sflag [#allocation21], %s698
        %s700 = sand.u32 %s403, 1
        %s701 = smul.addr %s700, 8
        %s702 = scalar_lea.vmem [#allocation20], %s701
        %p703 = scmp.lt.s32.totalorder %s46, 1
        %s704 = scalar_select %p703, %s46, 1
        %s705 = smul.addr %s704, 8
        %s706 = scalar_lea.vmem %s0, %s705
        %p707 = scmp.lt.s32.totalorder %s46, 1
        %s708 = scalar_select %p707, %s46, 1
        %s709 = smul.addr %s708, 2
        %s710 = smul.addr %s709, 8
        %s711 = scalar_lea.vmem %s1, %s710
        %p712 = scmp.lt.s32.totalorder %s46, 1
        %s713 = scalar_select %p712, %s46, 1
        %s714 = smul.addr %s713, 2
        %s715 = smul.addr %s714, 8
        %s716 = scalar_lea.vmem %s3, %s715
        %p717 = scmp.lt.s32.totalorder %s46, 1
        %s718 = scalar_select %p717, %s46, 1
        %s719 = smul.addr %s718, 8
        %s720 = scalar_lea.vmem %s6, %s719
        %p721 = scmp.lt.s32.totalorder %s48, 2
        %s722 = scalar_select %p721, %s48, 2
        %s723 = scalar_lea.vmem %s8, %s722
        %s724 = smul.u32 %s48, %s47
        %p725 = scmp.lt.s32.totalorder %s48, 1
        %s726 = scalar_select %p725, %s48, 1
        %s727 = smul.u32 %s726, %s47
        %p729 = scmp.eq.s32.totalorder %s47, 0
        %p730 = scmp.eq.s32.totalorder %s48, 0
        %p731 = pnand %p729, %p730
        %p732 = pneg %p731
        // Predicated region
        $region89: #{tpu_custom_call.1} parent=67 // pred_check
          _
        $region90: #{tpu_custom_call.1} parent=67 // pred_check_branch
          %734 = sbr.rel (%p731) target = $region92
        $region91: #{tpu_custom_call.1} parent=67 // pred_region
          %v735 = vld [vmem:[%s706] sm:$0xff]
          %v736 = vld [vmem:[%s582] sm:$0xff]
          %v737 = vld [vmem:[%s582 + $0x8] sm:$0xff]
          %v738 = vld [vmem:[%s582 + $0x10] sm:$0xff]
          %v739 = vld [vmem:[%s582 + $0x18] sm:$0xff]
          %vm740 = vcmask 130048
          %v741 = vsel %vm740, %v736, 0.0
          %v742 = vsel %vm740, %v737, 0.0
          %v743 = vadd.f32 %v741, %v742
          %v744 = vsel %vm740, %v738, 0.0
          %v745 = vadd.f32 %v743, %v744
          %v746 = vsel %vm740, %v739, 0.0
          %v747 = vadd.f32 %v745, %v746
          %v748 = vrcp.pop 4.0
          %v749 = vmul.f32 4.0, %v748
          %v750 = vsub.f32 1.0, %v749
          %v751 = vmul.f32 %v748, %v750
          %v752 = vadd.f32 %v748, %v751
          %vm753 = vweird.f32 %v748
          %v754 = vsel %vm753, %v748, %v752
          %v755 = vmul.f32 %v747, %v754
          %v756 = vld [vmem:[%s602] sm:$0xff]
          %v757 = vld [vmem:[%s602 + $0x8] sm:$0xff]
          %v758 = vld [vmem:[%s602 + $0x10] sm:$0xff]
          %v759 = vld [vmem:[%s602 + $0x18] sm:$0xff]
          %vm760 = vcmask 64512
          %v761 = vsel %vm760, %v756, 0.0
          %v762 = vsel %vm760, %v757, 0.0
          %v763 = vadd.f32 %v761, %v762
          %v764 = vsel %vm760, %v758, 0.0
          %v765 = vadd.f32 %v763, %v764
          %v766 = vsel %vm760, %v759, 0.0
          %v767 = vadd.f32 %v765, %v766
          %v768 = vmul.f32 %v767, %v754
          %v769 = vld [vmem:[%s9] sm:$0x3]
          %v770 = vld [vmem:[%s10] sm:$0x7]
          %v771 = vld [vmem:[%s711] sm:$0xff]
          %v772 = vld [vmem:[%s711 + $0x8] sm:$0xff]
          %v774 = vrot.slane %v769, 1
          %v775 = vperm.slane %v774, 0
          %v777 = vmul.f32 %v771, %v775
          %v778 = vmul.f32 %v772, %v775
          %779 = vadd.xlane.f32.xlu0 %v777
          %v780 = vpop.xlane.xlu0 %779
          %781 = vadd.xlane.f32.xlu0 %v778
          %v782 = vpop.xlane.xlu0 %781
          %v784 = vrot.slane %v770, 1
          %v785 = vperm.slane %v784, 0
          %v787 = vmul.f32 %v771, %v785
          %v788 = vmul.f32 %v772, %v785
          %789 = vadd.xlane.f32.xlu0 %v787
          %v790 = vpop.xlane.xlu0 %789
          %791 = vadd.xlane.f32.xlu0 %v788
          %v792 = vpop.xlane.xlu0 %791
          %v793 = vld [vmem:[%s592] sm:$0xff]
          %v794 = vrot.slane %v770, 2
          %v795 = vperm.slane %v794, 0
          %v797 = vmul.f32 %v793, %v795
          %798 = vadd.xlane.f32.xlu0 %v797
          %v799 = vpop.xlane.xlu0 %798
          %v800 = vperm.slane %v769, 0
          %v802 = vmul.f32 %v735, %v800
          %803 = vadd.xlane.f32.xlu0 %v802
          %v804 = vpop.xlane.xlu0 %803
          %v807 = vlaneseq
          %v808 = vand.u32 %v807, 127
          %v809 = vperm.slane %v780, %v808
          %v810 = vadd.s32 %v808, 4294967288
          %v811 = vperm.slane %v782, %v810
          %vm812 = vcmask 130112
          %v813 = vsel %vm812, %v811, %v809
          %vm814 = vcmask 1042434
          %v815 = vsel %vm814, %v813, %v813
          %vm816 = vcmask 1043459
          %v817 = vsel %vm816, %v813, %v815
          %vm818 = vcmask 1044484
          %v819 = vsel %vm818, %v813, %v817
          %vm820 = vcmask 1045509
          %v821 = vsel %vm820, %v813, %v819
          %vm822 = vcmask 1046534
          %v823 = vsel %vm822, %v813, %v821
          %vm824 = vcmask 1047559
          %v825 = vsel %vm824, %v813, %v823
          %v827 = vmul.f32 %v755, %v825
          %v828 = vsel %vm740, %v827, 0.0
          %829 = vadd.xlane.f32.xlu0 %v828
          %v830 = vpop.xlane.xlu0 %829
          %v831 = vadd.f32 %v804, %v830
          %s832 = sld [smem:[#allocation18]]
          %v833 = vstv %s832
          %v834 = vadd.f32 %v831, %v833
          %v835 = vperm.slane %v770, 0
          %v837 = vmul.f32 %v735, %v835
          %838 = vadd.xlane.f32.xlu0 %v837
          %v839 = vpop.xlane.xlu0 %838
          %v842 = vperm.slane %v790, %v808
          %v843 = vperm.slane %v792, %v810
          %v844 = vsel %vm812, %v843, %v842
          %v845 = vsel %vm814, %v844, %v844
          %v846 = vsel %vm816, %v844, %v845
          %v847 = vsel %vm818, %v844, %v846
          %v848 = vsel %vm820, %v844, %v847
          %v849 = vsel %vm822, %v844, %v848
          %v850 = vsel %vm824, %v844, %v849
          %v852 = vmul.f32 %v755, %v850
          %v853 = vsel %vm740, %v852, 0.0
          %854 = vadd.xlane.f32.xlu0 %v853
          %v855 = vpop.xlane.xlu0 %854
          %v856 = vadd.f32 %v839, %v855
          %v858 = vperm.slane %v799, %v808
          %v859 = vsel %vm814, %v858, %v858
          %v860 = vsel %vm816, %v858, %v859
          %v861 = vsel %vm818, %v858, %v860
          %v862 = vsel %vm820, %v858, %v861
          %v863 = vsel %vm822, %v858, %v862
          %v864 = vsel %vm824, %v858, %v863
          %v866 = vmul.f32 %v768, %v864
          %v867 = vsel %vm760, %v866, 0.0
          %868 = vadd.xlane.f32.xlu0 %v867
          %v869 = vpop.xlane.xlu0 %868
          %v870 = vadd.f32 %v856, %v869
          %s871 = sld [smem:[#allocation18 + $0x1]]
          %v872 = vstv %s871
          %v873 = vadd.f32 %v870, %v872
          %v874 = vxor.u32 %v834, 2147483648
          %v875 = vmul.f32 %v874, 1.442695
          %v876 = vpow.pop %v875
          %v877 = vadd.f32 %v876, 1.0
          %v878 = vrcp.pop %v877
          %v879 = vmul.f32 %v877, %v878
          %v880 = vsub.f32 1.0, %v879
          %v881 = vmul.f32 %v878, %v880
          %v882 = vadd.f32 %v878, %v881
          %vm883 = vweird.f32 %v877
          %vm884 = vweird.f32 %v878
          %vm885 = vmor %vm883, %vm884
          %v886 = vsel %vm885, %v878, %v882
          %v887 = vand.u32 2147483647, %v877
          %vm888 = vcmp.eq.f32.partialorder %v887, 8.507059e+37
          %v889 = vand.u32 %v877, 2147483648
          %v890 = vor.u32 1.1754944e-38, %v889
          %v891 = vsel %vm888, %v890, %v886
          %v892 = vmul.f32 1.0, %v891
          %v893 = vxor.u32 %v873, 2147483648
          %v894 = vmul.f32 %v893, 1.442695
          %v895 = vpow.pop %v894
          %v896 = vadd.f32 %v895, 1.0
          %v897 = vrcp.pop %v896
          %v898 = vmul.f32 %v896, %v897
          %v899 = vsub.f32 1.0, %v898
          %v900 = vmul.f32 %v897, %v899
          %v901 = vadd.f32 %v897, %v900
          %vm902 = vweird.f32 %v896
          %vm903 = vweird.f32 %v897
          %vm904 = vmor %vm902, %vm903
          %v905 = vsel %vm904, %v897, %v901
          %v906 = vand.u32 2147483647, %v896
          %vm907 = vcmp.eq.f32.partialorder %v906, 8.507059e+37
          %v908 = vand.u32 %v896, 2147483648
          %v909 = vor.u32 1.1754944e-38, %v908
          %v910 = vsel %vm907, %v909, %v905
          %v911 = vmul.f32 1.0, %v910
          %vm912 = vcmask 7168
          %913 = vst.msk [vmem:[#allocation4] sm:$0xff] %vm912, %v892
          %914 = vst.msk [vmem:[#allocation5] sm:$0xff] %vm912, %v911
          %v915 = vpack.c.bf16 %v755, %v755
          %vm916 = vcmask 125952
          %917 = vst.msk [vmem:[#allocation6] sm:$0xf] %vm916, %v915
          %v918 = vsub.f32 1.0, %v911
          %v919 = vmul.f32 %v918, %v768
          %v920 = vpack.c.bf16 %v919, %v919
          %vm921 = vcmask 60416
          %922 = vst.msk [vmem:[#allocation7] sm:$0xf] %vm921, %v920
          %v923 = vpack.c.bf16 %v735, %v735
          %924 = vst [vmem:[#allocation8] sm:$0xf] %v923
          %925 = vst.msk [vmem:[#allocation2] sm:$0xff] %vm912, -inf
          %926 = vst.msk [vmem:[#allocation3] sm:$0xff] %vm912, 0.0
        $region92: #{tpu_custom_call.1} parent=67 // pred_fallthru
          _
        %s927 = smul.u32 %s48, 128
        %p928 = scmp.lt.s32.totalorder %s927, 256
        %p929 = pnand %p729, %p928
        %p930 = pneg %p929
        // Predicated region
        $region93: #{tpu_custom_call.1} parent=67 // pred_check
          _
        $region94: #{tpu_custom_call.1} parent=67 // pred_check_branch
          %932 = sbr.rel (%p929) target = $region96
        $region95: #{tpu_custom_call.1} parent=67 // pred_region
          %v933 = vld [vmem:[#allocation8] sm:$0xf]
          %v934 = vld [vmem:[%s612] sm:$0xf]
          %v935 = vld [vmem:[%s612 + $0x4] sm:$0xf]
          %v936 = vld [vmem:[%s612 + $0x8] sm:$0xf]
          %v937 = vld [vmem:[%s612 + $0xc] sm:$0xf]
          %v938 = vld [vmem:[%s612 + $0x10] sm:$0xf]
          %v939 = vld [vmem:[%s612 + $0x14] sm:$0xf]
          %v940 = vld [vmem:[%s612 + $0x18] sm:$0xf]
          %v941 = vld [vmem:[%s612 + $0x1c] sm:$0xf]
          %v942 = vld [vmem:[%s612 + $0x20] sm:$0xf]
          %v943 = vld [vmem:[%s612 + $0x24] sm:$0xf]
          %v944 = vld [vmem:[%s612 + $0x28] sm:$0xf]
          %v945 = vld [vmem:[%s612 + $0x2c] sm:$0xf]
          %v946 = vld [vmem:[%s612 + $0x30] sm:$0xf]
          %v947 = vld [vmem:[%s612 + $0x34] sm:$0xf]
          %v948 = vld [vmem:[%s612 + $0x38] sm:$0xf]
          %v949 = vld [vmem:[%s612 + $0x3c] sm:$0xf]
          %v950 = vld [vmem:[%s723] sm:$0x1]
          %v952 = vperm.slane %v950, 0
          %v970 = vunpack.c.l.b16 %v934
          %v971 = vunpack.c.l.b16 %v935
          %v972 = vunpack.c.l.b16 %v936
          %v973 = vunpack.c.l.b16 %v937
          %v974 = vunpack.c.l.b16 %v938
          %v975 = vunpack.c.l.b16 %v939
          %v976 = vunpack.c.l.b16 %v940
          %v977 = vunpack.c.l.b16 %v941
          %v978 = vunpack.c.l.b16 %v942
          %v979 = vunpack.c.l.b16 %v943
          %v980 = vunpack.c.l.b16 %v944
          %v981 = vunpack.c.l.b16 %v945
          %v982 = vunpack.c.l.b16 %v946
          %v983 = vunpack.c.l.b16 %v947
          %v984 = vunpack.c.l.b16 %v948
          %v985 = vunpack.c.l.b16 %v949
          %v986 = vpack.c.b16 %v971, %v970
          %v987 = vpack.c.b16 %v973, %v972
          %v988 = vpack.c.b16 %v975, %v974
          %v989 = vpack.c.b16 %v977, %v976
          %v990 = vpack.c.b16 %v979, %v978
          %v991 = vpack.c.b16 %v981, %v980
          %v992 = vpack.c.b16 %v983, %v982
          %v993 = vpack.c.b16 %v985, %v984
          %1002 = vmatpush.bf16.msra.mxu0 %v993
          %1003 = vmatpush.bf16.msra.mxu0 %v992
          %1004 = vmatpush.bf16.msra.mxu0 %v991
          %1005 = vmatpush.bf16.msra.mxu0 %v990
          %1006 = vmatpush.bf16.msra.mxu0 %v989
          %1007 = vmatpush.bf16.msra.mxu0 %v988
          %1008 = vmatpush.bf16.msra.mxu0 %v987
          %1009 = vmatpush.bf16.msra.mxu0 %v986
          %1010 = vmatmul.bf16.gmra.mxu0 %v933
          %v1011 = vpop.f32.mrf.mxu0
          %v1012 = vadd.f32 %v952, %v1011
          %v1013 = vpop.f32.mrf.mxu0
          %1014 = vdwg.mxu0
          %v1015 = vld [vmem:[#allocation2] sm:$0xff]
          %1016 = vmax.xlane.f32.xlu0 %v1012
          %v1017 = vpop.xlane.xlu0 %1016
          %v1018 = vmax.f32 %v1015, %v1017
          %v1019 = vld [vmem:[#allocation3] sm:$0xff]
          %v1020 = vsub.f32 %v1015, %v1018
          %v1021 = vmul.f32 %v1020, 1.442695
          %v1022 = vpow.pop %v1021
          %v1023 = vmul.f32 %v1019, %v1022
          %1025 = vset.pattern.permute.xlu0 0
          %1026 = vperm.xlu0 %1025, %v1018
          %v1027 = vpop.permute.xlu0 %1026
          %v1029 = vsub.f32 %v1012, %v1027
          %v1030 = vmul.f32 %v1029, 1.442695
          %v1031 = vpow.pop %v1030
          %1032 = vadd.xlane.f32.xlu0 %v1031
          %v1033 = vpop.xlane.xlu0 %1032
          %v1034 = vadd.f32 %v1023, %v1033
          %vm1035 = vcmask 7168
          %1036 = vst.msk [vmem:[#allocation3] sm:$0xff] %vm1035, %v1034
          %1037 = vst.msk [vmem:[#allocation2] sm:$0xff] %vm1035, %v1018
        $region96: #{tpu_custom_call.1} parent=67 // pred_fallthru
          _
        %p1038 = scmp.eq.s32.totalorder %s47, 1
        // Predicated region
        $region97: #{tpu_custom_call.1} parent=67 // pred_check
          %p1039 = pneg %p1038
        $region98: #{tpu_custom_call.1} parent=67 // pred_check_branch
          %1041 = sbr.rel (%p1039) target = $region100
        $region99: #{tpu_custom_call.1} parent=67 // pred_region
          %v1042 = vld [vmem:[#allocation4] sm:$0xff]
          %v1043 = vld [vmem:[#allocation5] sm:$0xff]
          %v1044 = vld [vmem:[#allocation3] sm:$0xff]
          %v1045 = vrcp.pop %v1044
          %v1046 = vld [vmem:[#allocation8] sm:$0xf]
          %v1047 = vld [vmem:[%s612] sm:$0xf]
          %v1048 = vld [vmem:[%s612 + $0x4] sm:$0xf]
          %v1049 = vld [vmem:[%s612 + $0x8] sm:$0xf]
          %v1050 = vld [vmem:[%s612 + $0xc] sm:$0xf]
          %v1051 = vld [vmem:[%s612 + $0x10] sm:$0xf]
          %v1052 = vld [vmem:[%s612 + $0x14] sm:$0xf]
          %v1053 = vld [vmem:[%s612 + $0x18] sm:$0xf]
          %v1054 = vld [vmem:[%s612 + $0x1c] sm:$0xf]
          %v1055 = vld [vmem:[%s612 + $0x20] sm:$0xf]
          %v1056 = vld [vmem:[%s612 + $0x24] sm:$0xf]
          %v1057 = vld [vmem:[%s612 + $0x28] sm:$0xf]
          %v1058 = vld [vmem:[%s612 + $0x2c] sm:$0xf]
          %v1059 = vld [vmem:[%s612 + $0x30] sm:$0xf]
          %v1060 = vld [vmem:[%s612 + $0x34] sm:$0xf]
          %v1061 = vld [vmem:[%s612 + $0x38] sm:$0xf]
          %v1062 = vld [vmem:[%s612 + $0x3c] sm:$0xf]
          %v1063 = vld [vmem:[%s723] sm:$0x1]
          %v1065 = vperm.slane %v1063, 0
          %v1083 = vunpack.c.l.b16 %v1047
          %v1084 = vunpack.c.l.b16 %v1048
          %v1085 = vunpack.c.l.b16 %v1049
          %v1086 = vunpack.c.l.b16 %v1050
          %v1087 = vunpack.c.l.b16 %v1051
          %v1088 = vunpack.c.l.b16 %v1052
          %v1089 = vunpack.c.l.b16 %v1053
          %v1090 = vunpack.c.l.b16 %v1054
          %v1091 = vunpack.c.l.b16 %v1055
          %v1092 = vunpack.c.l.b16 %v1056
          %v1093 = vunpack.c.l.b16 %v1057
          %v1094 = vunpack.c.l.b16 %v1058
          %v1095 = vunpack.c.l.b16 %v1059
          %v1096 = vunpack.c.l.b16 %v1060
          %v1097 = vunpack.c.l.b16 %v1061
          %v1098 = vunpack.c.l.b16 %v1062
          %v1099 = vpack.c.b16 %v1084, %v1083
          %v1100 = vpack.c.b16 %v1086, %v1085
          %v1101 = vpack.c.b16 %v1088, %v1087
          %v1102 = vpack.c.b16 %v1090, %v1089
          %v1103 = vpack.c.b16 %v1092, %v1091
          %v1104 = vpack.c.b16 %v1094, %v1093
          %v1105 = vpack.c.b16 %v1096, %v1095
          %v1106 = vpack.c.b16 %v1098, %v1097
          %1115 = vmatpush.bf16.msra.mxu0 %v1106
          %1116 = vmatpush.bf16.msra.mxu0 %v1105
          %1117 = vmatpush.bf16.msra.mxu0 %v1104
          %1118 = vmatpush.bf16.msra.mxu0 %v1103
          %1119 = vmatpush.bf16.msra.mxu0 %v1102
          %1120 = vmatpush.bf16.msra.mxu0 %v1101
          %1121 = vmatpush.bf16.msra.mxu0 %v1100
          %1122 = vmatpush.bf16.msra.mxu0 %v1099
          %1123 = vmatmul.bf16.gmra.mxu0 %v1046
          %v1124 = vpop.f32.mrf.mxu0
          %v1125 = vadd.f32 %v1065, %v1124
          %v1126 = vpop.f32.mrf.mxu0
          %1127 = vdwg.mxu0
          %v1128 = vld [vmem:[#allocation2] sm:$0xff]
          %1130 = vset.pattern.permute.xlu0 0
          %1131 = vperm.xlu0 %1130, %v1128
          %v1132 = vpop.permute.xlu0 %1131
          %v1134 = vsub.f32 %v1125, %v1132
          %v1135 = vmul.f32 %v1134, 1.442695
          %v1136 = vpow.pop %v1135
          %1138 = vset.pattern.permute.xlu0 0
          %1139 = vperm.xlu0 %1138, %v1045
          %v1140 = vpop.permute.xlu0 %1139
          %v1142 = vmul.f32 %v1136, %v1140
          %v1143 = vlaneseq
          %v1144 = vand.u32 %v1143, 127
          %v1145 = vstv %s927
          %v1146 = vadd.s32 %v1144, %v1145
          %v1147 = vld [vmem:[%s716] sm:$0xff]
          %v1148 = vld [vmem:[%s716 + $0x8] sm:$0xff]
          %1149 = vset.pattern.permute.xlu0 0
          %1150 = vperm.xlu0 %1149, %v1147
          %v1151 = vpop.permute.xlu0 %1150
          %1152 = vset.pattern.permute.xlu0 0
          %1153 = vperm.xlu0 %1152, %v1148
          %v1154 = vpop.permute.xlu0 %1153
          %vm1155 = vcmp.eq.s32.totalorder %v1146, %v1151
          %vm1156 = vcmp.eq.s32.totalorder %v1146, %v1154
          %v1157 = vsel %vm1155, 1, 0
          %v1158 = vsel %vm1156, 1, 0
          %v1159 = vcvt.s32.f32 %v1157
          %v1160 = vcvt.s32.f32 %v1158
          %v1161 = vpack.c.bf16 %v1159, %v1159
          %v1162 = vpack.c.bf16 %v1160, %v1160
          %v1163 = vld [vmem:[#allocation6] sm:$0xf]
          %v1166 = vunpack.c.l.b16 %v1161
          %v1167 = vunpack.c.l.b16 %v1162
          %v1168 = vpack.c.b16 %v1167, %v1166
          %vm1170 = vcmask 130048
          %v1172 = vsel %vm1170, %v1163, 0
          %1174 = vmatpush.bf16.msra.mxu0 0
          %1175 = vmatpush.bf16.msra.mxu0 0
          %1176 = vmatpush.bf16.msra.mxu0 0
          %1177 = vmatpush.bf16.msra.mxu0 0
          %1178 = vmatpush.bf16.msra.mxu0 0
          %1179 = vmatpush.bf16.msra.mxu0 0
          %1180 = vmatpush.bf16.msra.mxu0 0
          %1181 = vmatpush.bf16.msra.mxu0 %v1168
          %1182 = vmatmul.bf16.gmra.mxu0 %v1172
          %v1183 = vpop.f32.mrf.mxu0
          %v1184 = vadd.f32 0.0, %v1183
          %v1185 = vpop.f32.mrf.mxu0
          %1186 = vdwg.mxu0
          %v1187 = vld [vmem:[%s720] sm:$0xff]
          %1188 = vset.pattern.permute.xlu0 0
          %1189 = vperm.xlu0 %1188, %v1187
          %v1190 = vpop.permute.xlu0 %1189
          %vm1191 = vcmp.eq.s32.totalorder %v1146, %v1190
          %v1192 = vsel %vm1191, 1, 0
          %v1193 = vcvt.s32.f32 %v1192
          %v1194 = vpack.c.bf16 %v1193, %v1193
          %v1195 = vld [vmem:[#allocation7] sm:$0xf]
          %vm1196 = vcmask 64512
          %v1198 = vsel %vm1196, %v1195, 0
          %vm1200 = vcmask 1043456
          %v1202 = vsel %vm1200, %v1194, 0
          %1204 = vmatpush.bf16.msra.mxu0 0
          %1205 = vmatpush.bf16.msra.mxu0 0
          %1206 = vmatpush.bf16.msra.mxu0 0
          %1207 = vmatpush.bf16.msra.mxu0 0
          %1208 = vmatpush.bf16.msra.mxu0 0
          %1209 = vmatpush.bf16.msra.mxu0 0
          %1210 = vmatpush.bf16.msra.mxu0 0
          %1211 = vmatpush.bf16.msra.mxu0 %v1202
          %1212 = vmatmul.bf16.gmra.mxu0 %v1198
          %v1213 = vpop.f32.mrf.mxu0
          %v1214 = vadd.f32 0.0, %v1213
          %v1215 = vpop.f32.mrf.mxu0
          %1216 = vdwg.mxu0
          %1218 = vset.pattern.permute.xlu0 0
          %1219 = vperm.xlu0 %1218, %v1042
          %v1220 = vpop.permute.xlu0 %1219
          %v1222 = vmul.f32 %v1220, %v1142
          %v1223 = vsub.f32 1.0, %v1042
          %1225 = vset.pattern.permute.xlu0 0
          %1226 = vperm.xlu0 %1225, %v1223
          %v1227 = vpop.permute.xlu0 %1226
          %v1229 = vmul.f32 %v1227, %v1184
          %v1230 = vadd.f32 %v1222, %v1229
          %1232 = vset.pattern.permute.xlu0 0
          %1233 = vperm.xlu0 %1232, %v1043
          %v1234 = vpop.permute.xlu0 %1233
          %v1236 = vmul.f32 %v1234, %v1230
          %v1237 = vadd.f32 %v1236, %v1214
          %v1238 = vlog2.pop %v1237
          %v1239 = vmul.f32 %v1238, 0.6931472
          %v1240 = vmax.f32 %v1239, -300.0
          %1241 = vst [vmem:[%s695] sm:$0xff] %v1240
          // Predicated region
          $region101: #{tpu_custom_call.1} parent=99 // pred_check
            %p1242 = pneg %p928
          $region102: #{tpu_custom_call.1} parent=99 // pred_check_branch
            %1244 = sbr.rel (%p1242) target = $region104
          $region103: #{tpu_custom_call.1} parent=99 // pred_region
            %v1245 = vlog2.pop %v1230
            %v1246 = vmul.f32 %v1245, 0.6931472
            %1247 = vst [vmem:[%s702] sm:$0xff] %v1246
          $region104: #{tpu_custom_call.1} parent=99 // pred_fallthru
            _
        $region100: #{tpu_custom_call.1} parent=67 // pred_fallthru
          _
        %s1248 = sand.u32 %s369, 1
        %s1249 = scalar_lea.sflag [#allocation11], %s1248
        %s1250 = sand.u32 %s369, 1
        %s1251 = smul.addr %s1250, 8
        %s1252 = scalar_lea.vmem [#allocation19], %s1251
        %s1253 = sand.u32 %s403, 1
        %s1254 = scalar_lea.sflag [#allocation21], %s1253
        %s1255 = sand.u32 %s403, 1
        %s1256 = smul.addr %s1255, 8
        %s1257 = scalar_lea.vmem [#allocation20], %s1256
        // Predicated region
        $region105: #{tpu_custom_call.1} parent=67 // pred_check
          %p1258 = pneg %p379
        $region106: #{tpu_custom_call.1} parent=67 // pred_check_branch
          %1260 = sbr.rel (%p1258) target = $region108
        $region107: #{tpu_custom_call.1} parent=67 // pred_region
          %s1261 = smul.u32 %s48, %s47
          %1263 = vsyncadd %s1249, 0
          %s1264 = smul.addr %s46, 3
          %s1265 = sadd.s32 %s1261, %s1264
          %s1266 = smul.addr %s1265, 8
          %s1267 = scalar_lea.hbm %s12, %s1266
          %s1269 = sshll.u32 %s1252, 4
          %s1270 = int_to_ptr.vmem [resolvable:$true] %s1269
          %s1271 = sshll.u32 %s1267, 4
          %s1272 = int_to_ptr.hbm [resolvable:$true] %s1271
          %1274 = dma.vmem_to_hbm [thread:$0]  %s1270, 128, %s1272, %s1249
        $region108: #{tpu_custom_call.1} parent=67 // pred_fallthru
          _
        // Predicated region
        $region109: #{tpu_custom_call.1} parent=67 // pred_check
          %p1275 = pneg %p413
        $region110: #{tpu_custom_call.1} parent=67 // pred_check_branch
          %1277 = sbr.rel (%p1275) target = $region112
        $region111: #{tpu_custom_call.1} parent=67 // pred_region
          %p1278 = scmp.lt.s32.totalorder %s48, 1
          %s1279 = scalar_select %p1278, %s48, 1
          %s1280 = smul.u32 %s1279, %s47
          %1282 = vsyncadd %s1254, 0
          %s1283 = smul.addr %s46, 2
          %s1284 = sadd.s32 %s1280, %s1283
          %s1285 = smul.addr %s1284, 8
          %s1286 = scalar_lea.hbm %s13, %s1285
          %s1288 = sshll.u32 %s1257, 4
          %s1289 = int_to_ptr.vmem [resolvable:$true] %s1288
          %s1290 = sshll.u32 %s1286, 4
          %s1291 = int_to_ptr.hbm [resolvable:$true] %s1290
          %1293 = dma.vmem_to_hbm [thread:$0]  %s1289, 128, %s1291, %s1254
        $region112: #{tpu_custom_call.1} parent=67 // pred_fallthru
          _
      $region68: #{tpu_custom_call.1} parent=5 // pred_fallthru
        _
      %p1294 = scmp.le.s32.totalorder 2, %s36
      // Predicated region
      $region113: #{tpu_custom_call.1} parent=5 // pred_check
        %p1295 = pneg %p1294
      $region114: #{tpu_custom_call.1} parent=5 // pred_check_branch
        %1297 = sbr.rel (%p1295) target = $region116
      $region115: #{tpu_custom_call.1} parent=5 // pred_region
        %s1298 = ssub.s32 %s36, 2
        // Predicated region
        $region117: #{tpu_custom_call.1} parent=115 // pred_check
          %p1299 = pneg %p385
        $region118: #{tpu_custom_call.1} parent=115 // pred_check_branch
          %1301 = sbr.rel (%p1299) target = $region120
        $region119: #{tpu_custom_call.1} parent=115 // pred_region
          %s1302 = sand.u32 %s370, 1
          %s1303 = scalar_lea.sflag [#allocation11], %s1302
          %s1304 = sand.u32 %s370, 1
          %s1305 = smul.addr %s1304, 8
          %s1306 = scalar_lea.vmem [#allocation19], %s1305
          %1308 = dma.done %s1303, 128
        $region120: #{tpu_custom_call.1} parent=115 // pred_fallthru
          _
        // Predicated region
        $region121: #{tpu_custom_call.1} parent=115 // pred_check
          %p1309 = pneg %p419
        $region122: #{tpu_custom_call.1} parent=115 // pred_check_branch
          %1311 = sbr.rel (%p1309) target = $region124
        $region123: #{tpu_custom_call.1} parent=115 // pred_region
          %s1312 = sand.u32 %s404, 1
          %s1313 = scalar_lea.sflag [#allocation21], %s1312
          %s1314 = sand.u32 %s404, 1
          %s1315 = smul.addr %s1314, 8
          %s1316 = scalar_lea.vmem [#allocation20], %s1315
          %1318 = dma.done %s1313, 128
        $region124: #{tpu_custom_call.1} parent=115 // pred_fallthru
          _
      $region116: #{tpu_custom_call.1} parent=5 // pred_fallthru
        _
    $region6: #{tpu_custom_call.1} parent=1 // loop_footer
      %s40 = sadd.s32 1, %s36
    $region7: #{tpu_custom_call.1} parent=1 // loop_footer_branch
      %35 = sbr.rel target = $region3
    $region8: #{tpu_custom_call.1} parent=1 // loop_exit
      _
    %1319 = vsyncpa [#allocation10], 1
    %s1320 = scalar_lea.sflag [#allocation10], 1
    %1321 = vsyncpa %s1320, 1
    %1322 = vsyncpa [#allocation14], 1
    %s1323 = scalar_lea.sflag [#allocation14], 1
    %1324 = vsyncpa %s1323, 1
    %1325 = vsyncpa [#allocation17], 1
    %s1326 = scalar_lea.sflag [#allocation17], 1
    %1327 = vsyncpa %s1326, 1
    %1328 = vsyncpa [#allocation11], 1
    %s1329 = scalar_lea.sflag [#allocation11], 1
    %1330 = vsyncpa %s1329, 1
    %1331 = vsyncpa [#allocation21], 1
    %s1332 = scalar_lea.sflag [#allocation21], 1
    %1333 = vsyncpa %s1332, 1
    %1334 = vsyncpa [#allocation12], 1
    %s1335 = scalar_lea.sflag [#allocation12], 1
    %1336 = vsyncpa %s1335, 1

</llo_original>
